<compile_context>
chip_gen: v5e
topology: v5e:2x2
jax: 0.10.0
libtpu: 0.0.40
codegen_flags: <defaults>
</compile_context>

<pallas_src>
import functools

import jax
import jax.numpy as jnp
from jax.experimental import pallas as pl
from jax.experimental.pallas import tpu as pltpu


def _vmem_limit_bytes(frac=0.75, fallback=48 * 1024 * 1024):
    # Generation-aware VMEM budget: ~48 MiB on v7x (64 MiB physical/TC),
    # ~96 MiB on v5e/v6e (128 MiB). Fallback is safe on every generation.
    try:
        return int(pltpu.get_tpu_info().vmem_capacity_bytes * frac)
    except Exception:
        return fallback


# ---------------------------------------------------------------------------
# Kernel 1: K/V projection with head-split output.
# Runs once per (batch, k-tile); hoisted out of the attention kernel so the
# projection is NOT recomputed for every query tile.
# ---------------------------------------------------------------------------
def kv_project_kernel(k_ref, v_ref, wk_ref, wv_ref, ko_ref, vo_ref, *,
                      n_head, d_k, d_v):
    xk = k_ref[0]                                          # (TK, D) native dtype
    xv = v_ref[0]
    k2 = jnp.dot(xk, wk_ref[...], preferred_element_type=jnp.float32)
    v2 = jnp.dot(xv, wv_ref[...], preferred_element_type=jnp.float32)
    # Head-split via static lane-aligned slab stores straight into the output
    # refs (no jnp.concatenate intermediate -> no extra VMEM copies).
    for h in range(n_head):
        ko_ref[0, h] = k2[:, h * d_k:(h + 1) * d_k].astype(ko_ref.dtype)
        vo_ref[0, h] = v2[:, h * d_v:(h + 1) * d_v].astype(vo_ref.dtype)


def project_kv(k_in, v_in, wk, wv, *, n_head, d_k, d_v, tile_k, vmem_limit):
    B, Lk, D = k_in.shape
    kernel = functools.partial(kv_project_kernel, n_head=n_head, d_k=d_k, d_v=d_v)
    return pl.pallas_call(
        kernel,
        out_shape=(jax.ShapeDtypeStruct((B, n_head, Lk, d_k), k_in.dtype),
                   jax.ShapeDtypeStruct((B, n_head, Lk, d_v), v_in.dtype)),
        grid_spec=pltpu.PrefetchScalarGridSpec(
            num_scalar_prefetch=0,
            grid=(B, Lk // tile_k),
            in_specs=[
                pl.BlockSpec((1, tile_k, D), lambda b, i: (b, i, 0)),          # k input
                pl.BlockSpec((1, tile_k, D), lambda b, i: (b, i, 0)),          # v input
                pl.BlockSpec((D, n_head * d_k), lambda b, i: (0, 0)),          # wk
                pl.BlockSpec((D, n_head * d_v), lambda b, i: (0, 0)),          # wv
            ],
            out_specs=[
                pl.BlockSpec((1, n_head, tile_k, d_k), lambda b, i: (b, 0, i, 0)),
                pl.BlockSpec((1, n_head, tile_k, d_v), lambda b, i: (b, 0, i, 0)),
            ],
        ),
        compiler_params=pltpu.CompilerParams(
            dimension_semantics=("parallel", "parallel"),
            vmem_limit_bytes=vmem_limit,
        ),
    )(k_in, v_in, wk, wv)


# ---------------------------------------------------------------------------
# Kernel 2: fused attention: Q projection (once per q-tile) + flash-style
# online-softmax attention over streamed head-split K/V tiles + output
# projection + residual + LayerNorm.
# ---------------------------------------------------------------------------
def mha_attn_kernel(xq_ref, k_ref, v_ref, wq_ref, wfc_ref, gamma_ref, beta_ref,
                    out_ref, q_s, m_s, l_s, acc_s, *, n_head, d_k, d_v, ln_eps):
    ki = pl.program_id(2)

    # ---- init (once per (batch, q-tile)): project Q, reset online-softmax state
    @pl.when(ki == 0)
    def _():
        xq = xq_ref[0]                                           # (TQ, D) native dtype
        q2 = jnp.dot(xq, wq_ref[...], preferred_element_type=jnp.float32)
        q2 = q2 * (1.0 / (d_k ** 0.5))                           # fold 1/temperature into Q
        for h in range(n_head):                                  # static slab stores to scratch
            q_s[h] = q2[:, h * d_k:(h + 1) * d_k].astype(q_s.dtype)
        m_s[...] = jnp.full(m_s.shape, -jnp.inf, m_s.dtype)
        l_s[...] = jnp.zeros(l_s.shape, l_s.dtype)
        acc_s[...] = jnp.zeros(acc_s.shape, acc_s.dtype)

    # ---- per K/V tile: batched-head attention on pre-projected head-split K/V
    k3 = k_ref[0]                                                # (H, TK, d_k) native dtype
    v3 = v_ref[0]                                                # (H, TK, d_v)
    q3 = q_s[...]                                                # (H, TQ, d_k)

    s = jnp.einsum('hqd,hkd->hqk', q3, k3,
                   preferred_element_type=jnp.float32)           # (H, TQ, TK) f32

    m_prev = m_s[...]                                            # (H, TQ, 1)
    m_new = jnp.maximum(m_prev, jnp.max(s, axis=-1, keepdims=True))
    alpha = jnp.exp(m_prev - m_new)
    p = jnp.exp(s - m_new)
    l_s[...] = alpha * l_s[...] + jnp.sum(p, axis=-1, keepdims=True)
    acc_s[...] = alpha * acc_s[...] + jnp.einsum(
        'hqk,hkd->hqd', p.astype(v3.dtype), v3, preferred_element_type=jnp.float32)
    m_s[...] = m_new

    # ---- finalize: per-head output projection (no concat), residual, LayerNorm
    @pl.when(ki == pl.num_programs(2) - 1)
    def _():
        inv_l = pl.reciprocal(l_s[...], approx=True)             # EUP slot, ~free
        o3 = (acc_s[...] * inv_l).astype(wfc_ref.dtype)          # (H, TQ, d_v)
        # proj = sum_h o3[h] @ wfc[h]  (equivalent to concat-then-matmul)
        proj = jnp.einsum('hqv,hvd->hqd', o3, wfc_ref[...],
                          preferred_element_type=jnp.float32).sum(axis=0)   # (TQ, D)
        resid = proj + xq_ref[0].astype(jnp.float32)             # dropout = identity (eval)
        gamma = gamma_ref[...].astype(jnp.float32)
        beta = beta_ref[...].astype(jnp.float32)
        mean = jnp.mean(resid, axis=-1, keepdims=True)
        var = jnp.mean((resid - mean) ** 2, axis=-1, keepdims=True)
        y = (resid - mean) * jax.lax.rsqrt(var + ln_eps) * gamma + beta
        out_ref[0] = y.astype(out_ref.dtype)


def multi_head_attention_pallas(q_in, k_in, v_in, params, *, n_head, d_k, d_v,
                                tile_q=256, tile_k=256):
    wq, wk, wv, wfc, gamma, beta = params
    B, Lq, D = q_in.shape
    Lk = k_in.shape[1]
    assert v_in.shape[1] == Lk
    tq = min(tile_q, Lq)
    tk = min(tile_k, Lk)
    assert Lq % tq == 0 and Lk % tk == 0, "sequence lengths must divide tile sizes"
    assert D % 128 == 0 and d_k % 128 == 0 and d_v % 128 == 0, "lane-aligned dims expected"

    vmem_limit = _vmem_limit_bytes()

    # Stage 1: head-split K/V projection (computed once, reused by all q-tiles).
    k_heads, v_heads = project_kv(k_in, v_in, wk, wv, n_head=n_head, d_k=d_k,
                                  d_v=d_v, tile_k=tk, vmem_limit=vmem_limit)

    # Head-split output projection weight in the wrapper (free major-dim reshape).
    wfc3 = wfc.reshape(n_head, d_v, D)

    # Stage 2: fused attention + output projection + residual + LayerNorm.
    grid = (B, Lq // tq, Lk // tk)
    kernel = functools.partial(mha_attn_kernel, n_head=n_head, d_k=d_k, d_v=d_v,
                               ln_eps=1e-6)
    return pl.pallas_call(
        kernel,
        out_shape=jax.ShapeDtypeStruct((B, Lq, D), q_in.dtype),
        grid_spec=pltpu.PrefetchScalarGridSpec(
            num_scalar_prefetch=0,
            grid=grid,
            in_specs=[
                pl.BlockSpec((1, tq, D), lambda b, qi, ki: (b, qi, 0)),            # q input / residual
                pl.BlockSpec((1, n_head, tk, d_k), lambda b, qi, ki: (b, 0, ki, 0)),  # K (head-split)
                pl.BlockSpec((1, n_head, tk, d_v), lambda b, qi, ki: (b, 0, ki, 0)),  # V (head-split)
                pl.BlockSpec((D, n_head * d_k), lambda b, qi, ki: (0, 0)),         # wq
                pl.BlockSpec((n_head, d_v, D), lambda b, qi, ki: (0, 0, 0)),       # wfc (head-split)
                pl.BlockSpec((1, D), lambda b, qi, ki: (0, 0)),                    # ln gamma
                pl.BlockSpec((1, D), lambda b, qi, ki: (0, 0)),                    # ln beta
            ],
            out_specs=pl.BlockSpec((1, tq, D), lambda b, qi, ki: (b, qi, 0)),
            scratch_shapes=[
                pltpu.VMEM((n_head, tq, d_k), q_in.dtype),   # scaled Q (head-split)
                pltpu.VMEM((n_head, tq, 1), jnp.float32),    # running max
                pltpu.VMEM((n_head, tq, 1), jnp.float32),    # running denom
                pltpu.VMEM((n_head, tq, d_v), jnp.float32),  # output accumulator
            ],
        ),
        compiler_params=pltpu.CompilerParams(
            dimension_semantics=("parallel", "parallel", "arbitrary"),
            vmem_limit_bytes=vmem_limit,
        ),
    )(q_in, k_heads, v_heads, wq, wfc3, gamma, beta)


def init_mha_params(key, d_model, n_head, d_k, d_v, dtype=jnp.float32):
    k0, k1, k2, k3 = jax.random.split(key, 4)
    # Stored as [in_features, out_features] (transposed vs torch nn.Linear.weight).
    wq = jax.random.normal(k0, (d_model, n_head * d_k), dtype) * 0.05
    wk = jax.random.normal(k1, (d_model, n_head * d_k), dtype) * 0.05
    wv = jax.random.normal(k2, (d_model, n_head * d_v), dtype) * 0.05
    wfc = jax.random.normal(k3, (n_head * d_v, d_model), dtype) * 0.05
    gamma = jnp.ones((1, d_model), dtype)
    beta = jnp.zeros((1, d_model), dtype)
    return (wq, wk, wv, wfc, gamma, beta)


# Pure-JAX reference for correctness checking.
def mha_ref(q_in, k_in, v_in, params, *, n_head, d_k, d_v):
    wq, wk, wv, wfc, gamma, beta = params
    B, Lq, D = q_in.shape
    Lk = k_in.shape[1]
    q = (q_in @ wq).reshape(B, Lq, n_head, d_k).transpose(0, 2, 1, 3)
    k = (k_in @ wk).reshape(B, Lk, n_head, d_k).transpose(0, 2, 1, 3)
    v = (v_in @ wv).reshape(B, Lk, n_head, d_v).transpose(0, 2, 1, 3)
    attn = jax.nn.softmax(
        jnp.einsum("bhqd,bhkd->bhqk", q / (d_k ** 0.5), k), axis=-1)
    o = jnp.einsum("bhqk,bhkd->bhqd", attn, v).transpose(0, 2, 1, 3).reshape(B, Lq, n_head * d_v)
    o = o @ wfc + q_in
    mean = o.mean(-1, keepdims=True)
    var = ((o - mean) ** 2).mean(-1, keepdims=True)
    return (o - mean) / jnp.sqrt(var + 1e-6) * gamma + beta


if __name__ == "__main__":
    # Small, lane-aligned config: d_model and head dims are multiples of 128.
    d_model, n_head, d_k, d_v = 256, 2, 128, 128
    B, len_q, len_k = 2, 256, 512

    key = jax.random.PRNGKey(0)
    kp, kq, kk = jax.random.split(key, 3)
    params = init_mha_params(kp, d_model, n_head, d_k, d_v)

    q_in = jax.random.normal(kq, (B, len_q, d_model), jnp.float32)
    kv_in = jax.random.normal(kk, (B, len_k, d_model), jnp.float32)

    # tile_q=128 (len_q=256) exercises q-tiling + K/V projection reuse;
    # tile_k=256 (len_k=512) exercises the streaming online-softmax path at
    # full 256-deep PV contraction for v6e/v7x.
    out = multi_head_attention_pallas(q_in, kv_in, kv_in, params,
                                      n_head=n_head, d_k=d_k, d_v=d_v,
                                      tile_q=128, tile_k=256)
    out = jax.block_until_ready(out)

    ref = mha_ref(q_in, kv_in, kv_in, params, n_head=n_head, d_k=d_k, d_v=d_v)
    assert out.shape == (B, len_q, d_model)
    err = jnp.max(jnp.abs(out - ref))
    assert jnp.allclose(out, ref, atol=3e-3, rtol=3e-3), f"mismatch vs reference, max err {err}"

    print("KERNEL_OK")
</pallas_src>

<mosaic_0001>
module attributes {stable_mosaic.version = 11 : i64} {
  func.func @kv_project_kernel(%arg0: i32, %arg1: i32, %arg2: memref<1x256x256xf32, #tpu.memory_space<vmem>>, %arg3: memref<1x256x256xf32, #tpu.memory_space<vmem>>, %arg4: memref<256x256xf32, #tpu.memory_space<vmem>>, %arg5: memref<256x256xf32, #tpu.memory_space<vmem>>, %arg6: memref<1x2x256x128xf32, #tpu.memory_space<vmem>>, %arg7: memref<1x2x256x128xf32, #tpu.memory_space<vmem>>) attributes {dimension_semantics = [#tpu.dimension_semantics<parallel>, #tpu.dimension_semantics<parallel>], iteration_bounds = array<i64: 2, 2>, scalar_prefetch = 0 : i64, scratch_operands = 0 : i64, tpu.core_type = #tpu.core_type<tc>, window_params = [{transform_indices = @transform_0, window_bounds = array<i64: 1, 256, 256>}, {transform_indices = @transform_1, window_bounds = array<i64: 1, 256, 256>}, {pipeline_mode = #tpu.pipeline_mode<synchronous>, transform_indices = @transform_2, window_bounds = array<i64: 256, 256>}, {pipeline_mode = #tpu.pipeline_mode<synchronous>, transform_indices = @transform_3, window_bounds = array<i64: 256, 256>}, {transform_indices = @transform_4, window_bounds = array<i64: 1, 2, 256, 128>}, {transform_indices = @transform_5, window_bounds = array<i64: 1, 2, 256, 128>}]} {
    %c0 = arith.constant 0 : index
    %c0_0 = arith.constant 0 : index
    %c0_1 = arith.constant 0 : index
    %0 = vector.load %arg2[%c0, %c0_0, %c0_1] : memref<1x256x256xf32, #tpu.memory_space<vmem>>, vector<1x256x256xf32>
    %1 = vector.shape_cast %0 : vector<1x256x256xf32> to vector<256x256xf32>
    %c0_2 = arith.constant 0 : index
    %c0_3 = arith.constant 0 : index
    %c0_4 = arith.constant 0 : index
    %2 = vector.load %arg3[%c0_2, %c0_3, %c0_4] : memref<1x256x256xf32, #tpu.memory_space<vmem>>, vector<1x256x256xf32>
    %3 = vector.shape_cast %2 : vector<1x256x256xf32> to vector<256x256xf32>
    %c0_5 = arith.constant 0 : index
    %c0_6 = arith.constant 0 : index
    %4 = vector.load %arg4[%c0_5, %c0_6] : memref<256x256xf32, #tpu.memory_space<vmem>>, vector<256x256xf32>
    %cst = arith.constant dense<0.000000e+00> : vector<256x256xf32>
    %5 = tpu.matmul %1, %4, %cst {dimension_numbers = #tpu.dot_dimension_numbers<[1], [0], [0], [1], [0, 0, 1, 1], [], []>} : vector<256x256xf32>, vector<256x256xf32>, vector<256x256xf32> -> vector<256x256xf32>
    %c0_7 = arith.constant 0 : index
    %c0_8 = arith.constant 0 : index
    %6 = vector.load %arg5[%c0_7, %c0_8] : memref<256x256xf32, #tpu.memory_space<vmem>>, vector<256x256xf32>
    %cst_9 = arith.constant dense<0.000000e+00> : vector<256x256xf32>
    %7 = tpu.matmul %3, %6, %cst_9 {dimension_numbers = #tpu.dot_dimension_numbers<[1], [0], [0], [1], [0, 0, 1, 1], [], []>} : vector<256x256xf32>, vector<256x256xf32>, vector<256x256xf32> -> vector<256x256xf32>
    %8 = vector.extract_strided_slice %5 {offsets = [0, 0], sizes = [256, 128], strides = [1, 1]} : vector<256x256xf32> to vector<256x128xf32>
    %c0_10 = arith.constant 0 : index
    %c0_11 = arith.constant 0 : index
    %c0_12 = arith.constant 0 : index
    %c0_13 = arith.constant 0 : index
    %9 = vector.load %arg6[%c0_10, %c0_11, %c0_12, %c0_13] : memref<1x2x256x128xf32, #tpu.memory_space<vmem>>, vector<1x1x256x128xf32>
    %10 = vector.shape_cast %9 : vector<1x1x256x128xf32> to vector<256x128xf32>
    %11 = vector.shape_cast %8 : vector<256x128xf32> to vector<1x1x256x128xf32>
    tpu.vector_store %arg6[%c0_10, %c0_11, %c0_12, %c0_13], %11 {strides = array<i32>} : memref<1x2x256x128xf32, #tpu.memory_space<vmem>>, vector<1x1x256x128xf32>,
    %12 = vector.extract_strided_slice %7 {offsets = [0, 0], sizes = [256, 128], strides = [1, 1]} : vector<256x256xf32> to vector<256x128xf32>
    %c0_14 = arith.constant 0 : index
    %c0_15 = arith.constant 0 : index
    %c0_16 = arith.constant 0 : index
    %c0_17 = arith.constant 0 : index
    %13 = vector.load %arg7[%c0_14, %c0_15, %c0_16, %c0_17] : memref<1x2x256x128xf32, #tpu.memory_space<vmem>>, vector<1x1x256x128xf32>
    %14 = vector.shape_cast %13 : vector<1x1x256x128xf32> to vector<256x128xf32>
    %15 = vector.shape_cast %12 : vector<256x128xf32> to vector<1x1x256x128xf32>
    tpu.vector_store %arg7[%c0_14, %c0_15, %c0_16, %c0_17], %15 {strides = array<i32>} : memref<1x2x256x128xf32, #tpu.memory_space<vmem>>, vector<1x1x256x128xf32>,
    %16 = vector.extract_strided_slice %5 {offsets = [0, 128], sizes = [256, 128], strides = [1, 1]} : vector<256x256xf32> to vector<256x128xf32>
    %c0_18 = arith.constant 0 : index
    %c1 = arith.constant 1 : index
    %c0_19 = arith.constant 0 : index
    %c0_20 = arith.constant 0 : index
    %17 = vector.load %arg6[%c0_18, %c1, %c0_19, %c0_20] : memref<1x2x256x128xf32, #tpu.memory_space<vmem>>, vector<1x1x256x128xf32>
    %18 = vector.shape_cast %17 : vector<1x1x256x128xf32> to vector<256x128xf32>
    %19 = vector.shape_cast %16 : vector<256x128xf32> to vector<1x1x256x128xf32>
    tpu.vector_store %arg6[%c0_18, %c1, %c0_19, %c0_20], %19 {strides = array<i32>} : memref<1x2x256x128xf32, #tpu.memory_space<vmem>>, vector<1x1x256x128xf32>,
    %20 = vector.extract_strided_slice %7 {offsets = [0, 128], sizes = [256, 128], strides = [1, 1]} : vector<256x256xf32> to vector<256x128xf32>
    %c0_21 = arith.constant 0 : index
    %c1_22 = arith.constant 1 : index
    %c0_23 = arith.constant 0 : index
    %c0_24 = arith.constant 0 : index
    %21 = vector.load %arg7[%c0_21, %c1_22, %c0_23, %c0_24] : memref<1x2x256x128xf32, #tpu.memory_space<vmem>>, vector<1x1x256x128xf32>
    %22 = vector.shape_cast %21 : vector<1x1x256x128xf32> to vector<256x128xf32>
    %23 = vector.shape_cast %20 : vector<256x128xf32> to vector<1x1x256x128xf32>
    tpu.vector_store %arg7[%c0_21, %c1_22, %c0_23, %c0_24], %23 {strides = array<i32>} : memref<1x2x256x128xf32, #tpu.memory_space<vmem>>, vector<1x1x256x128xf32>,
    return
  }
  func.func @transform_0(%arg0: i32, %arg1: i32) -> (i32, i32, i32) {
    %c0_i32 = arith.constant 0 : i32
    %c0_i32_0 = arith.constant 0 : i32
    return %arg0, %arg1, %c0_i32 : i32, i32, i32
  }
  func.func @transform_1(%arg0: i32, %arg1: i32) -> (i32, i32, i32) {
    %c0_i32 = arith.constant 0 : i32
    %c0_i32_0 = arith.constant 0 : i32
    return %arg0, %arg1, %c0_i32 : i32, i32, i32
  }
  func.func @transform_2(%arg0: i32, %arg1: i32) -> (i32, i32) {
    %c0_i32 = arith.constant 0 : i32
    %c0_i32_0 = arith.constant 0 : i32
    %c0_i32_1 = arith.constant 0 : i32
    return %c0_i32, %c0_i32_0 : i32, i32
  }
  func.func @transform_3(%arg0: i32, %arg1: i32) -> (i32, i32) {
    %c0_i32 = arith.constant 0 : i32
    %c0_i32_0 = arith.constant 0 : i32
    %c0_i32_1 = arith.constant 0 : i32
    return %c0_i32, %c0_i32_0 : i32, i32
  }
  func.func @transform_4(%arg0: i32, %arg1: i32) -> (i32, i32, i32, i32) {
    %c0_i32 = arith.constant 0 : i32
    %c0_i32_0 = arith.constant 0 : i32
    %c0_i32_1 = arith.constant 0 : i32
    return %arg0, %c0_i32, %arg1, %c0_i32_0 : i32, i32, i32, i32
  }
  func.func @transform_5(%arg0: i32, %arg1: i32) -> (i32, i32, i32, i32) {
    %c0_i32 = arith.constant 0 : i32
    %c0_i32_0 = arith.constant 0 : i32
    %c0_i32_1 = arith.constant 0 : i32
    return %arg0, %c0_i32, %arg1, %c0_i32_0 : i32, i32, i32, i32
  }
}

</mosaic_0001>

<llo_original>
// kernel: tpu_custom_call.1
$region0: #{tpu_custom_call.1}
  #allocation0 [shape = 'u32[]', space=smem, size = 0x4, offset = 0x4, fixed_abs, tag = 'smem constant byte address 0x4 - core index']
  #allocation1 [shape = 'u32[72,128]{1,0:T(1,128)}', space=vmem, size = 0x9000, scoped, tag = 'internal scratch']
  #allocation13 [shape = 's32[]', space=sflag, size = 0x4, offset = 0, fixed_abs, tag = 'sflag constant byte address 0x0 - dummy sync flag']
  #allocation15 [shape = 's32[]', space=sflag, size = 0x4, offset = 0, fixed_abs, tag = 'sflag constant byte address 0x0 - dummy sync flag']
  %s0 = inlined_call_operand.hbm [shape: f32[2,512,256], index: 0, kind: input, shape index: {}]
  %s1 = inlined_call_operand.hbm [shape: f32[2,512,256], index: 1, kind: input, shape index: {}]
  %s2 = inlined_call_operand.hbm [shape: f32[256,256], index: 2, kind: input, shape index: {}]
  %s3 = inlined_call_operand.hbm [shape: f32[256,256], index: 3, kind: input, shape index: {}]
  %s4 = inlined_call_operand.hbm [shape: f32[2,2,512,128], index: 4, kind: output, shape index: {0}]
  %s5 = inlined_call_operand.hbm [shape: f32[2,2,512,128], index: 5, kind: output, shape index: {1}]
  %6 = xla_tuple %s4, %s5
  %s7 = sld [smem:[#allocation0]]
  $region73: #{tpu_custom_call.1} parent=0
    _
  %s9 = ssub.s32 1, %s7
  %s10 = scalar_select 0, %s9, %s7
  $region1: #{tpu_custom_call.1} parent=0
    #allocation2 [shape = 'u8[524288]{0}', space=vmem, size = 0x80000, scoped, tag = 'input window, operand 0']
    #allocation3 [shape = 's32[2]{0}', space=sflag, size = 0x8, scoped, tag = 'scoped memory for tpu_custom_call.1']
    #allocation4 [shape = 's32[2]{0}', space=sflag, size = 0x8, scoped, tag = 'scoped memory for tpu_custom_call.1']
    #allocation5 [shape = 'u8[524288]{0}', space=vmem, size = 0x80000, scoped, tag = 'input window, operand 1']
    #allocation6 [shape = 's32[2]{0}', space=sflag, size = 0x8, scoped, tag = 'scoped memory for tpu_custom_call.1']
    #allocation7 [shape = 'u8[262144]{0}', space=vmem, size = 0x40000, scoped, tag = 'input window, operand 2, single buffered']
    #allocation8 [shape = 'u8[262144]{0}', space=vmem, size = 0x40000, scoped, tag = 'input window, operand 3, single buffered']
    #allocation9 [shape = 's32[1]{0}', space=sflag, size = 0x4, scoped, tag = 'scoped memory for tpu_custom_call.1']
    #allocation10 [shape = 'u8[524288]{0}', space=vmem, size = 0x80000, scoped, tag = 'output window, operand 0']
    #allocation11 [shape = 'u8[524288]{0}', space=vmem, size = 0x80000, scoped, tag = 'output window, operand 1']
    #allocation12 [shape = 's32[2]{0}', space=sflag, size = 0x8, scoped, tag = 'scoped memory for tpu_custom_call.1']
    %11 = vsyncpa [#allocation3], 0
    %s12 = scalar_lea.sflag [#allocation3], 1
    %13 = vsyncpa %s12, 0
    %14 = vsyncpa [#allocation6], 0
    %s15 = scalar_lea.sflag [#allocation6], 1
    %16 = vsyncpa %s15, 0
    %17 = vsyncpa [#allocation9], 0
    %18 = vsyncpa [#allocation4], 0
    %s19 = scalar_lea.sflag [#allocation4], 1
    %20 = vsyncpa %s19, 0
    %21 = vsyncpa [#allocation12], 0
    %s22 = scalar_lea.sflag [#allocation12], 1
    %23 = vsyncpa %s22, 0
    loop: start=0, step=1, limit=6
    $region2: #{tpu_custom_call.1} parent=1 // loop_pre_header
      _
    $region3: #{tpu_custom_call.1} parent=1 // loop_header
      %s25 = sphi 0, %s29
      %p26 = scmp.ge.s32.totalorder %s25, 6
      %s32 = sphi 0, %s44
      %s33 = sphi 0, %s40
      %s34 = sphi 0, %s32
      %s35 = sphi 0, %s33
      %s36 = sphi 0, %s34
      %s37 = sphi 0, %s35
      %s49 = sphi 0, %s51
      %s52 = sphi 0, %s49
      %s53 = sphi 0, %s52
      %s69 = sphi 0, %s53
      %s77 = sphi 0, %s79
      %s80 = sphi 0, %s77
      %s81 = sphi 0, %s80
      %s97 = sphi 0, %s81
      %s101 = sphi 0, %s101
      %s103 = sphi 0, %s101
      %s104 = sphi 0, %s103
      %s118 = sphi 0, %s104
      %s122 = sphi 0, %s122
      %s124 = sphi 0, %s122
      %s125 = sphi 0, %s124
      %s139 = sphi 0, %s125
      %s147 = sphi 0, %s149
      %s150 = sphi 0, %s147
      %s151 = sphi 0, %s150
      %s167 = sphi 0, %s151
      %s175 = sphi 0, %s177
      %s178 = sphi 0, %s175
      %s179 = sphi 0, %s178
      %s195 = sphi 0, %s179
    $region4: #{tpu_custom_call.1} parent=1 // loop_header_branch
      %28 = sbr.rel (%p26) target = $region8
    $region5: #{tpu_custom_call.1} parent=1 // loop_body
      %s30 = ssub.s32 %s25, 1
      %s31 = ssub.s32 %s25, 2
      %s38 = sadd.s32 1, %s33
      %p39 = scmp.ge.s32.totalorder %s38, 2
      %s40 = scalar_select %p39, 0, %s38
      %s41 = sadd.s32 1, %s32
      %s42 = scalar_select %p39, %s41, %s32
      %p43 = scmp.ge.s32.totalorder %s42, 2
      %s44 = scalar_select %p43, 0, %s42
      %s45 = ssub.s32 %s32, %s44
      %s46 = ssub.s32 %s33, %s40
      %s47 = sor.u32 %s45, %s46
      %p48 = scmp.eq.s32.totalorder %s47, 0
      %s50 = sadd.s32 %s49, 1
      %s51 = scalar_select %p48, %s49, %s50
      %p54 = pneg %p48
      %p55 = scmp.eq.s32.totalorder %s25, 3
      %p56 = por %p54, %p55
      %p57 = scmp.ne.s32.totalorder %s49, %s52
      %p58 = scmp.eq.s32.totalorder %s25, 0
      %p59 = por %p57, %p58
      %p60 = scmp.ne.s32.totalorder %s49, %s52
      %p61 = scmp.eq.s32.totalorder %s30, 3
      %p62 = por %p60, %p61
      %p63 = scmp.ne.s32.totalorder %s52, %s53
      %p64 = scmp.eq.s32.totalorder %s30, 0
      %p65 = por %p63, %p64
      %p66 = scmp.ne.s32.totalorder %s52, %s53
      %p67 = scmp.eq.s32.totalorder %s31, 3
      %p68 = por %p66, %p67
      %p70 = scmp.ne.s32.totalorder %s53, %s69
      %p71 = scmp.eq.s32.totalorder %s31, 0
      %p72 = por %p70, %p71
      %s73 = ssub.s32 %s32, %s44
      %s74 = ssub.s32 %s33, %s40
      %s75 = sor.u32 %s73, %s74
      %p76 = scmp.eq.s32.totalorder %s75, 0
      %s78 = sadd.s32 %s77, 1
      %s79 = scalar_select %p76, %s77, %s78
      %p82 = pneg %p76
      %p83 = scmp.eq.s32.totalorder %s25, 3
      %p84 = por %p82, %p83
      %p85 = scmp.ne.s32.totalorder %s77, %s80
      %p86 = scmp.eq.s32.totalorder %s25, 0
      %p87 = por %p85, %p86
      %p88 = scmp.ne.s32.totalorder %s77, %s80
      %p89 = scmp.eq.s32.totalorder %s30, 3
      %p90 = por %p88, %p89
      %p91 = scmp.ne.s32.totalorder %s80, %s81
      %p92 = scmp.eq.s32.totalorder %s30, 0
      %p93 = por %p91, %p92
      %p94 = scmp.ne.s32.totalorder %s80, %s81
      %p95 = scmp.eq.s32.totalorder %s31, 3
      %p96 = por %p94, %p95
      %p98 = scmp.ne.s32.totalorder %s81, %s97
      %p99 = scmp.eq.s32.totalorder %s31, 0
      %p100 = por %p98, %p99
      %s102 = sadd.s32 %s101, 1
      %p105 = scmp.eq.s32.totalorder %s25, 3
      %p106 = scmp.ne.s32.totalorder %s101, %s103
      %p107 = scmp.eq.s32.totalorder %s25, 0
      %p108 = por %p106, %p107
      %p109 = scmp.ne.s32.totalorder %s101, %s103
      %p110 = scmp.eq.s32.totalorder %s30, 3
      %p111 = por %p109, %p110
      %p112 = scmp.ne.s32.totalorder %s103, %s104
      %p113 = scmp.eq.s32.totalorder %s30, 0
      %p114 = por %p112, %p113
      %p115 = scmp.ne.s32.totalorder %s103, %s104
      %p116 = scmp.eq.s32.totalorder %s31, 3
      %p117 = por %p115, %p116
      %p119 = scmp.ne.s32.totalorder %s104, %s118
      %p120 = scmp.eq.s32.totalorder %s31, 0
      %p121 = por %p119, %p120
      %s123 = sadd.s32 %s122, 1
      %p126 = scmp.eq.s32.totalorder %s25, 3
      %p127 = scmp.ne.s32.totalorder %s122, %s124
      %p128 = scmp.eq.s32.totalorder %s25, 0
      %p129 = por %p127, %p128
      %p130 = scmp.ne.s32.totalorder %s122, %s124
      %p131 = scmp.eq.s32.totalorder %s30, 3
      %p132 = por %p130, %p131
      %p133 = scmp.ne.s32.totalorder %s124, %s125
      %p134 = scmp.eq.s32.totalorder %s30, 0
      %p135 = por %p133, %p134
      %p136 = scmp.ne.s32.totalorder %s124, %s125
      %p137 = scmp.eq.s32.totalorder %s31, 3
      %p138 = por %p136, %p137
      %p140 = scmp.ne.s32.totalorder %s125, %s139
      %p141 = scmp.eq.s32.totalorder %s31, 0
      %p142 = por %p140, %p141
      %s143 = ssub.s32 %s32, %s44
      %s144 = ssub.s32 %s33, %s40
      %s145 = sor.u32 %s143, %s144
      %p146 = scmp.eq.s32.totalorder %s145, 0
      %s148 = sadd.s32 %s147, 1
      %s149 = scalar_select %p146, %s147, %s148
      %p152 = pneg %p146
      %p153 = scmp.eq.s32.totalorder %s25, 3
      %p154 = por %p152, %p153
      %p155 = scmp.ne.s32.totalorder %s147, %s150
      %p156 = scmp.eq.s32.totalorder %s25, 0
      %p157 = por %p155, %p156
      %p158 = scmp.ne.s32.totalorder %s147, %s150
      %p159 = scmp.eq.s32.totalorder %s30, 3
      %p160 = por %p158, %p159
      %p161 = scmp.ne.s32.totalorder %s150, %s151
      %p162 = scmp.eq.s32.totalorder %s30, 0
      %p163 = por %p161, %p162
      %p164 = scmp.ne.s32.totalorder %s150, %s151
      %p165 = scmp.eq.s32.totalorder %s31, 3
      %p166 = por %p164, %p165
      %p168 = scmp.ne.s32.totalorder %s151, %s167
      %p169 = scmp.eq.s32.totalorder %s31, 0
      %p170 = por %p168, %p169
      %s171 = ssub.s32 %s32, %s44
      %s172 = ssub.s32 %s33, %s40
      %s173 = sor.u32 %s171, %s172
      %p174 = scmp.eq.s32.totalorder %s173, 0
      %s176 = sadd.s32 %s175, 1
      %s177 = scalar_select %p174, %s175, %s176
      %p180 = pneg %p174
      %p181 = scmp.eq.s32.totalorder %s25, 3
      %p182 = por %p180, %p181
      %p183 = scmp.ne.s32.totalorder %s175, %s178
      %p184 = scmp.eq.s32.totalorder %s25, 0
      %p185 = por %p183, %p184
      %p186 = scmp.ne.s32.totalorder %s175, %s178
      %p187 = scmp.eq.s32.totalorder %s30, 3
      %p188 = por %p186, %p187
      %p189 = scmp.ne.s32.totalorder %s178, %s179
      %p190 = scmp.eq.s32.totalorder %s30, 0
      %p191 = por %p189, %p190
      %p192 = scmp.ne.s32.totalorder %s178, %s179
      %p193 = scmp.eq.s32.totalorder %s31, 3
      %p194 = por %p192, %p193
      %p196 = scmp.ne.s32.totalorder %s179, %s195
      %p197 = scmp.eq.s32.totalorder %s31, 0
      %p198 = por %p196, %p197
      %p199 = scmp.le.s32.totalorder 1, %s25
      %p200 = scmp.lt.s32.totalorder %s25, 5
      %p201 = pnand %p199, %p200
      %p202 = pneg %p201
      // Predicated region
      $region9: #{tpu_custom_call.1} parent=5 // pred_check
        _
      $region10: #{tpu_custom_call.1} parent=5 // pred_check_branch
        %204 = sbr.rel (%p201) target = $region12
      $region11: #{tpu_custom_call.1} parent=5 // pred_region
        %s205 = ssub.s32 %s25, 1
        // Predicated region
        $region13: #{tpu_custom_call.1} parent=11 // pred_check
          %p206 = pneg %p114
        $region14: #{tpu_custom_call.1} parent=11 // pred_check_branch
          %208 = sbr.rel (%p206) target = $region16
        $region15: #{tpu_custom_call.1} parent=11 // pred_region
          %210 = vsyncadd [#allocation6], 0
          %s211 = sshll.u32 %s2, 4
          %s212 = int_to_ptr.hbm [resolvable:$true] %s211
          %s213 = sshll.u32 [#allocation7], 4
          %s214 = int_to_ptr.vmem [resolvable:$true] %s213
          %219 = dma.hbm_to_vmem [thread:$0]  %s212, 8192, %s214, [#allocation6], 256, 256, 16
        $region16: #{tpu_custom_call.1} parent=11 // pred_fallthru
          _
        // Predicated region
        $region17: #{tpu_custom_call.1} parent=11 // pred_check
          %p220 = pneg %p135
        $region18: #{tpu_custom_call.1} parent=11 // pred_check_branch
          %222 = sbr.rel (%p220) target = $region20
        $region19: #{tpu_custom_call.1} parent=11 // pred_region
          %224 = vsyncadd [#allocation9], 0
          %s225 = sshll.u32 %s3, 4
          %s226 = int_to_ptr.hbm [resolvable:$true] %s225
          %s227 = sshll.u32 [#allocation8], 4
          %s228 = int_to_ptr.vmem [resolvable:$true] %s227
          %233 = dma.hbm_to_vmem [thread:$0]  %s226, 8192, %s228, [#allocation9], 256, 256, 16
        $region20: #{tpu_custom_call.1} parent=11 // pred_fallthru
          _
      $region12: #{tpu_custom_call.1} parent=5 // pred_fallthru
        _
      %p234 = scmp.lt.s32.totalorder %s25, 4
      // Predicated region
      $region21: #{tpu_custom_call.1} parent=5 // pred_check
        %p235 = pneg %p234
      $region22: #{tpu_custom_call.1} parent=5 // pred_check_branch
        %237 = sbr.rel (%p235) target = $region24
      $region23: #{tpu_custom_call.1} parent=5 // pred_region
        // Predicated region
        $region25: #{tpu_custom_call.1} parent=23 // pred_check
          %p238 = pneg %p59
        $region26: #{tpu_custom_call.1} parent=23 // pred_check_branch
          %240 = sbr.rel (%p238) target = $region28
        $region27: #{tpu_custom_call.1} parent=23 // pred_region
          %s241 = sand.u32 %s49, 1
          %s242 = scalar_lea.sflag [#allocation3], %s241
          %s243 = sand.u32 %s49, 1
          %s244 = smul.addr %s243, 512
          %s245 = scalar_lea.vmem [#allocation2], %s244
          %s246 = smul.u32 32, %s33
          %248 = vsyncadd %s242, 0
          %s249 = smul.addr %s246, 2
          %s250 = smul.addr %s32, 128
          %s251 = sadd.s32 %s249, %s250
          %s252 = smul.addr %s251, 8
          %s253 = scalar_lea.hbm %s0, %s252
          %s254 = sshll.u32 %s253, 4
          %s255 = int_to_ptr.hbm [resolvable:$true] %s254
          %s256 = sshll.u32 %s245, 4
          %s257 = int_to_ptr.vmem [resolvable:$true] %s256
          %262 = dma.hbm_to_vmem [thread:$0]  %s255, 8192, %s257, %s242, 256, 256, 16
        $region28: #{tpu_custom_call.1} parent=23 // pred_fallthru
          _
        // Predicated region
        $region29: #{tpu_custom_call.1} parent=23 // pred_check
          %p263 = pneg %p87
        $region30: #{tpu_custom_call.1} parent=23 // pred_check_branch
          %265 = sbr.rel (%p263) target = $region32
        $region31: #{tpu_custom_call.1} parent=23 // pred_region
          %s266 = sand.u32 %s25, 1
          %s267 = scalar_lea.sflag [#allocation6], %s266
          %s268 = sand.u32 %s77, 1
          %s269 = smul.addr %s268, 512
          %s270 = scalar_lea.vmem [#allocation5], %s269
          %s271 = smul.u32 32, %s33
          %273 = vsyncadd %s267, 0
          %s274 = smul.addr %s271, 2
          %s275 = smul.addr %s32, 128
          %s276 = sadd.s32 %s274, %s275
          %s277 = smul.addr %s276, 8
          %s278 = scalar_lea.hbm %s1, %s277
          %s279 = sshll.u32 %s278, 4
          %s280 = int_to_ptr.hbm [resolvable:$true] %s279
          %s281 = sshll.u32 %s270, 4
          %s282 = int_to_ptr.vmem [resolvable:$true] %s281
          %287 = dma.hbm_to_vmem [thread:$0]  %s280, 8192, %s282, %s267, 256, 256, 16
        $region32: #{tpu_custom_call.1} parent=23 // pred_fallthru
          _
      $region24: #{tpu_custom_call.1} parent=5 // pred_fallthru
        _
      %p288 = scmp.le.s32.totalorder 1, %s25
      %p289 = scmp.lt.s32.totalorder %s25, 5
      %p290 = pnand %p288, %p289
      %p291 = pneg %p290
      // Predicated region
      $region33: #{tpu_custom_call.1} parent=5 // pred_check
        _
      $region34: #{tpu_custom_call.1} parent=5 // pred_check_branch
        %293 = sbr.rel (%p290) target = $region36
      $region35: #{tpu_custom_call.1} parent=5 // pred_region
        %s294 = ssub.s32 %s25, 1
        %s295 = sand.u32 %s52, 1
        %s296 = scalar_lea.sflag [#allocation3], %s295
        %s297 = sand.u32 %s52, 1
        %s298 = smul.addr %s297, 512
        %s299 = scalar_lea.vmem [#allocation2], %s298
        // Predicated region
        $region37: #{tpu_custom_call.1} parent=35 // pred_check
          %p300 = pneg %p65
        $region38: #{tpu_custom_call.1} parent=35 // pred_check_branch
          %302 = sbr.rel (%p300) target = $region40
        $region39: #{tpu_custom_call.1} parent=35 // pred_region
          %304 = dma.done %s296, 8192
        $region40: #{tpu_custom_call.1} parent=35 // pred_fallthru
          _
        %s305 = sand.u32 %s30, 1
        %s306 = scalar_lea.sflag [#allocation6], %s305
        %s307 = sand.u32 %s80, 1
        %s308 = smul.addr %s307, 512
        %s309 = scalar_lea.vmem [#allocation5], %s308
        // Predicated region
        $region41: #{tpu_custom_call.1} parent=35 // pred_check
          %p310 = pneg %p93
        $region42: #{tpu_custom_call.1} parent=35 // pred_check_branch
          %312 = sbr.rel (%p310) target = $region44
        $region43: #{tpu_custom_call.1} parent=35 // pred_region
          %314 = dma.done %s306, 8192
        $region44: #{tpu_custom_call.1} parent=35 // pred_fallthru
          _
        // Predicated region
        $region45: #{tpu_custom_call.1} parent=35 // pred_check
          %p315 = pneg %p114
        $region46: #{tpu_custom_call.1} parent=35 // pred_check_branch
          %317 = sbr.rel (%p315) target = $region48
        $region47: #{tpu_custom_call.1} parent=35 // pred_region
          %319 = dma.done [#allocation6], 8192
        $region48: #{tpu_custom_call.1} parent=35 // pred_fallthru
          _
        // Predicated region
        $region49: #{tpu_custom_call.1} parent=35 // pred_check
          %p320 = pneg %p135
        $region50: #{tpu_custom_call.1} parent=35 // pred_check_branch
          %322 = sbr.rel (%p320) target = $region52
        $region51: #{tpu_custom_call.1} parent=35 // pred_region
          %324 = dma.done [#allocation9], 8192
        $region52: #{tpu_custom_call.1} parent=35 // pred_fallthru
          _
        %s325 = sand.u32 %s52, 1
        %s326 = scalar_lea.sflag [#allocation3], %s325
        %s327 = sand.u32 %s52, 1
        %s328 = smul.addr %s327, 512
        %s329 = scalar_lea.vmem [#allocation2], %s328
        %p330 = pneg %p65
        %p331 = pneg %p62
        %s332 = sand.u32 %s30, 1
        %s333 = scalar_lea.sflag [#allocation6], %s332
        %s334 = sand.u32 %s80, 1
        %s335 = smul.addr %s334, 512
        %s336 = scalar_lea.vmem [#allocation5], %s335
        %p337 = pneg %p93
        %p338 = pneg %p90
        %p339 = pneg %p114
        %p340 = pneg %p111
        %p341 = pneg %p135
        %p342 = pneg %p132
        %p343 = pneg %p163
        %p344 = pneg %p160
        %s345 = sand.u32 %s150, 1
        %s346 = scalar_lea.sflag [#allocation4], %s345
        %s347 = sand.u32 %s150, 1
        %s348 = smul.addr %s347, 512
        %s349 = scalar_lea.vmem [#allocation10], %s348
        %p350 = pneg %p191
        %p351 = pneg %p188
        %s352 = sand.u32 %s178, 1
        %s353 = scalar_lea.sflag [#allocation12], %s352
        %s354 = sand.u32 %s178, 1
        %s355 = smul.addr %s354, 512
        %s356 = scalar_lea.vmem [#allocation11], %s355
        %s357 = smul.u32 32, %s35
        %s358 = smul.u32 32, %s35
        %s359 = smul.u32 32, %s35
        %s360 = smul.u32 32, %s35
        %v361 = vld [vmem:[%s299] sm:$0xff]
        %v362 = vld [vmem:[%s299 + $0x8] sm:$0xff]
        %v363 = vld [vmem:[%s299 + $0x10] sm:$0xff]
        %v364 = vld [vmem:[%s299 + $0x18] sm:$0xff]
        %v365 = vld [vmem:[%s299 + $0x20] sm:$0xff]
        %v366 = vld [vmem:[%s299 + $0x28] sm:$0xff]
        %v367 = vld [vmem:[%s299 + $0x30] sm:$0xff]
        %v368 = vld [vmem:[%s299 + $0x38] sm:$0xff]
        %v369 = vld [vmem:[%s299 + $0x40] sm:$0xff]
        %v370 = vld [vmem:[%s299 + $0x48] sm:$0xff]
        %v371 = vld [vmem:[%s299 + $0x50] sm:$0xff]
        %v372 = vld [vmem:[%s299 + $0x58] sm:$0xff]
        %v373 = vld [vmem:[%s299 + $0x60] sm:$0xff]
        %v374 = vld [vmem:[%s299 + $0x68] sm:$0xff]
        %v375 = vld [vmem:[%s299 + $0x70] sm:$0xff]
        %v376 = vld [vmem:[%s299 + $0x78] sm:$0xff]
        %v377 = vld [vmem:[%s299 + $0x80] sm:$0xff]
        %v378 = vld [vmem:[%s299 + $0x88] sm:$0xff]
        %v379 = vld [vmem:[%s299 + $0x90] sm:$0xff]
        %v380 = vld [vmem:[%s299 + $0x98] sm:$0xff]
        %v381 = vld [vmem:[%s299 + $0xa0] sm:$0xff]
        %v382 = vld [vmem:[%s299 + $0xa8] sm:$0xff]
        %v383 = vld [vmem:[%s299 + $0xb0] sm:$0xff]
        %v384 = vld [vmem:[%s299 + $0xb8] sm:$0xff]
        %v385 = vld [vmem:[%s299 + $0xc0] sm:$0xff]
        %v386 = vld [vmem:[%s299 + $0xc8] sm:$0xff]
        %v387 = vld [vmem:[%s299 + $0xd0] sm:$0xff]
        %v388 = vld [vmem:[%s299 + $0xd8] sm:$0xff]
        %v389 = vld [vmem:[%s299 + $0xe0] sm:$0xff]
        %v390 = vld [vmem:[%s299 + $0xe8] sm:$0xff]
        %v391 = vld [vmem:[%s299 + $0xf0] sm:$0xff]
        %v392 = vld [vmem:[%s299 + $0xf8] sm:$0xff]
        %v393 = vld [vmem:[%s299 + $0x100] sm:$0xff]
        %v394 = vld [vmem:[%s299 + $0x108] sm:$0xff]
        %v395 = vld [vmem:[%s299 + $0x110] sm:$0xff]
        %v396 = vld [vmem:[%s299 + $0x118] sm:$0xff]
        %v397 = vld [vmem:[%s299 + $0x120] sm:$0xff]
        %v398 = vld [vmem:[%s299 + $0x128] sm:$0xff]
        %v399 = vld [vmem:[%s299 + $0x130] sm:$0xff]
        %v400 = vld [vmem:[%s299 + $0x138] sm:$0xff]
        %v401 = vld [vmem:[%s299 + $0x140] sm:$0xff]
        %v402 = vld [vmem:[%s299 + $0x148] sm:$0xff]
        %v403 = vld [vmem:[%s299 + $0x150] sm:$0xff]
        %v404 = vld [vmem:[%s299 + $0x158] sm:$0xff]
        %v405 = vld [vmem:[%s299 + $0x160] sm:$0xff]
        %v406 = vld [vmem:[%s299 + $0x168] sm:$0xff]
        %v407 = vld [vmem:[%s299 + $0x170] sm:$0xff]
        %v408 = vld [vmem:[%s299 + $0x178] sm:$0xff]
        %v409 = vld [vmem:[%s299 + $0x180] sm:$0xff]
        %v410 = vld [vmem:[%s299 + $0x188] sm:$0xff]
        %v411 = vld [vmem:[%s299 + $0x190] sm:$0xff]
        %v412 = vld [vmem:[%s299 + $0x198] sm:$0xff]
        %v413 = vld [vmem:[%s299 + $0x1a0] sm:$0xff]
        %v414 = vld [vmem:[%s299 + $0x1a8] sm:$0xff]
        %v415 = vld [vmem:[%s299 + $0x1b0] sm:$0xff]
        %v416 = vld [vmem:[%s299 + $0x1b8] sm:$0xff]
        %v417 = vld [vmem:[%s299 + $0x1c0] sm:$0xff]
        %v418 = vld [vmem:[%s299 + $0x1c8] sm:$0xff]
        %v419 = vld [vmem:[%s299 + $0x1d0] sm:$0xff]
        %v420 = vld [vmem:[%s299 + $0x1d8] sm:$0xff]
        %v421 = vld [vmem:[%s299 + $0x1e0] sm:$0xff]
        %v422 = vld [vmem:[%s299 + $0x1e8] sm:$0xff]
        %v423 = vld [vmem:[%s299 + $0x1f0] sm:$0xff]
        %v424 = vld [vmem:[%s299 + $0x1f8] sm:$0xff]
        %v425 = vld [vmem:[%s309] sm:$0xff]
        %v426 = vld [vmem:[%s309 + $0x8] sm:$0xff]
        %v427 = vld [vmem:[%s309 + $0x10] sm:$0xff]
        %v428 = vld [vmem:[%s309 + $0x18] sm:$0xff]
        %v429 = vld [vmem:[%s309 + $0x20] sm:$0xff]
        %v430 = vld [vmem:[%s309 + $0x28] sm:$0xff]
        %v431 = vld [vmem:[%s309 + $0x30] sm:$0xff]
        %v432 = vld [vmem:[%s309 + $0x38] sm:$0xff]
        %v433 = vld [vmem:[%s309 + $0x40] sm:$0xff]
        %v434 = vld [vmem:[%s309 + $0x48] sm:$0xff]
        %v435 = vld [vmem:[%s309 + $0x50] sm:$0xff]
        %v436 = vld [vmem:[%s309 + $0x58] sm:$0xff]
        %v437 = vld [vmem:[%s309 + $0x60] sm:$0xff]
        %v438 = vld [vmem:[%s309 + $0x68] sm:$0xff]
        %v439 = vld [vmem:[%s309 + $0x70] sm:$0xff]
        %v440 = vld [vmem:[%s309 + $0x78] sm:$0xff]
        %v441 = vld [vmem:[%s309 + $0x80] sm:$0xff]
        %v442 = vld [vmem:[%s309 + $0x88] sm:$0xff]
        %v443 = vld [vmem:[%s309 + $0x90] sm:$0xff]
        %v444 = vld [vmem:[%s309 + $0x98] sm:$0xff]
        %v445 = vld [vmem:[%s309 + $0xa0] sm:$0xff]
        %v446 = vld [vmem:[%s309 + $0xa8] sm:$0xff]
        %v447 = vld [vmem:[%s309 + $0xb0] sm:$0xff]
        %v448 = vld [vmem:[%s309 + $0xb8] sm:$0xff]
        %v449 = vld [vmem:[%s309 + $0xc0] sm:$0xff]
        %v450 = vld [vmem:[%s309 + $0xc8] sm:$0xff]
        %v451 = vld [vmem:[%s309 + $0xd0] sm:$0xff]
        %v452 = vld [vmem:[%s309 + $0xd8] sm:$0xff]
        %v453 = vld [vmem:[%s309 + $0xe0] sm:$0xff]
        %v454 = vld [vmem:[%s309 + $0xe8] sm:$0xff]
        %v455 = vld [vmem:[%s309 + $0xf0] sm:$0xff]
        %v456 = vld [vmem:[%s309 + $0xf8] sm:$0xff]
        %v457 = vld [vmem:[%s309 + $0x100] sm:$0xff]
        %v458 = vld [vmem:[%s309 + $0x108] sm:$0xff]
        %v459 = vld [vmem:[%s309 + $0x110] sm:$0xff]
        %v460 = vld [vmem:[%s309 + $0x118] sm:$0xff]
        %v461 = vld [vmem:[%s309 + $0x120] sm:$0xff]
        %v462 = vld [vmem:[%s309 + $0x128] sm:$0xff]
        %v463 = vld [vmem:[%s309 + $0x130] sm:$0xff]
        %v464 = vld [vmem:[%s309 + $0x138] sm:$0xff]
        %v465 = vld [vmem:[%s309 + $0x140] sm:$0xff]
        %v466 = vld [vmem:[%s309 + $0x148] sm:$0xff]
        %v467 = vld [vmem:[%s309 + $0x150] sm:$0xff]
        %v468 = vld [vmem:[%s309 + $0x158] sm:$0xff]
        %v469 = vld [vmem:[%s309 + $0x160] sm:$0xff]
        %v470 = vld [vmem:[%s309 + $0x168] sm:$0xff]
        %v471 = vld [vmem:[%s309 + $0x170] sm:$0xff]
        %v472 = vld [vmem:[%s309 + $0x178] sm:$0xff]
        %v473 = vld [vmem:[%s309 + $0x180] sm:$0xff]
        %v474 = vld [vmem:[%s309 + $0x188] sm:$0xff]
        %v475 = vld [vmem:[%s309 + $0x190] sm:$0xff]
        %v476 = vld [vmem:[%s309 + $0x198] sm:$0xff]
        %v477 = vld [vmem:[%s309 + $0x1a0] sm:$0xff]
        %v478 = vld [vmem:[%s309 + $0x1a8] sm:$0xff]
        %v479 = vld [vmem:[%s309 + $0x1b0] sm:$0xff]
        %v480 = vld [vmem:[%s309 + $0x1b8] sm:$0xff]
        %v481 = vld [vmem:[%s309 + $0x1c0] sm:$0xff]
        %v482 = vld [vmem:[%s309 + $0x1c8] sm:$0xff]
        %v483 = vld [vmem:[%s309 + $0x1d0] sm:$0xff]
        %v484 = vld [vmem:[%s309 + $0x1d8] sm:$0xff]
        %v485 = vld [vmem:[%s309 + $0x1e0] sm:$0xff]
        %v486 = vld [vmem:[%s309 + $0x1e8] sm:$0xff]
        %v487 = vld [vmem:[%s309 + $0x1f0] sm:$0xff]
        %v488 = vld [vmem:[%s309 + $0x1f8] sm:$0xff]
        %v489 = vld [vmem:[#allocation7] sm:$0xff]
        %v490 = vld [vmem:[#allocation7 + $0x8] sm:$0xff]
        %v491 = vld [vmem:[#allocation7 + $0x10] sm:$0xff]
        %v492 = vld [vmem:[#allocation7 + $0x18] sm:$0xff]
        %v493 = vld [vmem:[#allocation7 + $0x20] sm:$0xff]
        %v494 = vld [vmem:[#allocation7 + $0x28] sm:$0xff]
        %v495 = vld [vmem:[#allocation7 + $0x30] sm:$0xff]
        %v496 = vld [vmem:[#allocation7 + $0x38] sm:$0xff]
        %v497 = vld [vmem:[#allocation7 + $0x40] sm:$0xff]
        %v498 = vld [vmem:[#allocation7 + $0x48] sm:$0xff]
        %v499 = vld [vmem:[#allocation7 + $0x50] sm:$0xff]
        %v500 = vld [vmem:[#allocation7 + $0x58] sm:$0xff]
        %v501 = vld [vmem:[#allocation7 + $0x60] sm:$0xff]
        %v502 = vld [vmem:[#allocation7 + $0x68] sm:$0xff]
        %v503 = vld [vmem:[#allocation7 + $0x70] sm:$0xff]
        %v504 = vld [vmem:[#allocation7 + $0x78] sm:$0xff]
        %v505 = vld [vmem:[#allocation7 + $0x80] sm:$0xff]
        %v506 = vld [vmem:[#allocation7 + $0x88] sm:$0xff]
        %v507 = vld [vmem:[#allocation7 + $0x90] sm:$0xff]
        %v508 = vld [vmem:[#allocation7 + $0x98] sm:$0xff]
        %v509 = vld [vmem:[#allocation7 + $0xa0] sm:$0xff]
        %v510 = vld [vmem:[#allocation7 + $0xa8] sm:$0xff]
        %v511 = vld [vmem:[#allocation7 + $0xb0] sm:$0xff]
        %v512 = vld [vmem:[#allocation7 + $0xb8] sm:$0xff]
        %v513 = vld [vmem:[#allocation7 + $0xc0] sm:$0xff]
        %v514 = vld [vmem:[#allocation7 + $0xc8] sm:$0xff]
        %v515 = vld [vmem:[#allocation7 + $0xd0] sm:$0xff]
        %v516 = vld [vmem:[#allocation7 + $0xd8] sm:$0xff]
        %v517 = vld [vmem:[#allocation7 + $0xe0] sm:$0xff]
        %v518 = vld [vmem:[#allocation7 + $0xe8] sm:$0xff]
        %v519 = vld [vmem:[#allocation7 + $0xf0] sm:$0xff]
        %v520 = vld [vmem:[#allocation7 + $0xf8] sm:$0xff]
        %v521 = vld [vmem:[#allocation7 + $0x100] sm:$0xff]
        %v522 = vld [vmem:[#allocation7 + $0x108] sm:$0xff]
        %v523 = vld [vmem:[#allocation7 + $0x110] sm:$0xff]
        %v524 = vld [vmem:[#allocation7 + $0x118] sm:$0xff]
        %v525 = vld [vmem:[#allocation7 + $0x120] sm:$0xff]
        %v526 = vld [vmem:[#allocation7 + $0x128] sm:$0xff]
        %v527 = vld [vmem:[#allocation7 + $0x130] sm:$0xff]
        %v528 = vld [vmem:[#allocation7 + $0x138] sm:$0xff]
        %v529 = vld [vmem:[#allocation7 + $0x140] sm:$0xff]
        %v530 = vld [vmem:[#allocation7 + $0x148] sm:$0xff]
        %v531 = vld [vmem:[#allocation7 + $0x150] sm:$0xff]
        %v532 = vld [vmem:[#allocation7 + $0x158] sm:$0xff]
        %v533 = vld [vmem:[#allocation7 + $0x160] sm:$0xff]
        %v534 = vld [vmem:[#allocation7 + $0x168] sm:$0xff]
        %v535 = vld [vmem:[#allocation7 + $0x170] sm:$0xff]
        %v536 = vld [vmem:[#allocation7 + $0x178] sm:$0xff]
        %v537 = vld [vmem:[#allocation7 + $0x180] sm:$0xff]
        %v538 = vld [vmem:[#allocation7 + $0x188] sm:$0xff]
        %v539 = vld [vmem:[#allocation7 + $0x190] sm:$0xff]
        %v540 = vld [vmem:[#allocation7 + $0x198] sm:$0xff]
        %v541 = vld [vmem:[#allocation7 + $0x1a0] sm:$0xff]
        %v542 = vld [vmem:[#allocation7 + $0x1a8] sm:$0xff]
        %v543 = vld [vmem:[#allocation7 + $0x1b0] sm:$0xff]
        %v544 = vld [vmem:[#allocation7 + $0x1b8] sm:$0xff]
        %v545 = vld [vmem:[#allocation7 + $0x1c0] sm:$0xff]
        %v546 = vld [vmem:[#allocation7 + $0x1c8] sm:$0xff]
        %v547 = vld [vmem:[#allocation7 + $0x1d0] sm:$0xff]
        %v548 = vld [vmem:[#allocation7 + $0x1d8] sm:$0xff]
        %v549 = vld [vmem:[#allocation7 + $0x1e0] sm:$0xff]
        %v550 = vld [vmem:[#allocation7 + $0x1e8] sm:$0xff]
        %v551 = vld [vmem:[#allocation7 + $0x1f0] sm:$0xff]
        %v552 = vld [vmem:[#allocation7 + $0x1f8] sm:$0xff]
        %553 = vmatpush.msra.mxu0 %v519
        %554 = vmatpush.msra.mxu0 %v517
        %555 = vmatpush.msra.mxu0 %v515
        %556 = vmatpush.msra.mxu0 %v513
        %557 = vmatpush.msra.mxu0 %v511
        %558 = vmatpush.msra.mxu0 %v509
        %559 = vmatpush.msra.mxu0 %v507
        %560 = vmatpush.msra.mxu0 %v505
        %561 = vmatpush.msra.mxu0 %v503
        %562 = vmatpush.msra.mxu0 %v501
        %563 = vmatpush.msra.mxu0 %v499
        %564 = vmatpush.msra.mxu0 %v497
        %565 = vmatpush.msra.mxu0 %v495
        %566 = vmatpush.msra.mxu0 %v493
        %567 = vmatpush.msra.mxu0 %v491
        %568 = vmatpush.msra.mxu0 %v489
        %569 = vmatmul.f32.gmra.mxu0 %v361
        %v570 = vpop.f32.mrf.mxu0
        %v571 = vadd.f32 0.0, %v570
        %572 = vmatmul.f32.gmra.mxu0 %v363
        %v573 = vpop.f32.mrf.mxu0
        %v574 = vadd.f32 0.0, %v573
        %575 = vmatmul.f32.gmra.mxu0 %v365
        %v576 = vpop.f32.mrf.mxu0
        %v577 = vadd.f32 0.0, %v576
        %578 = vmatmul.f32.gmra.mxu0 %v367
        %v579 = vpop.f32.mrf.mxu0
        %v580 = vadd.f32 0.0, %v579
        %581 = vmatmul.f32.gmra.mxu0 %v369
        %v582 = vpop.f32.mrf.mxu0
        %v583 = vadd.f32 0.0, %v582
        %584 = vmatmul.f32.gmra.mxu0 %v371
        %v585 = vpop.f32.mrf.mxu0
        %v586 = vadd.f32 0.0, %v585
        %587 = vmatmul.f32.gmra.mxu0 %v373
        %v588 = vpop.f32.mrf.mxu0
        %v589 = vadd.f32 0.0, %v588
        %590 = vmatmul.f32.gmra.mxu0 %v375
        %v591 = vpop.f32.mrf.mxu0
        %v592 = vadd.f32 0.0, %v591
        %593 = vmatmul.f32.gmra.mxu0 %v377
        %v594 = vpop.f32.mrf.mxu0
        %v595 = vadd.f32 0.0, %v594
        %596 = vmatmul.f32.gmra.mxu0 %v379
        %v597 = vpop.f32.mrf.mxu0
        %v598 = vadd.f32 0.0, %v597
        %599 = vmatmul.f32.gmra.mxu0 %v381
        %v600 = vpop.f32.mrf.mxu0
        %v601 = vadd.f32 0.0, %v600
        %602 = vmatmul.f32.gmra.mxu0 %v383
        %v603 = vpop.f32.mrf.mxu0
        %v604 = vadd.f32 0.0, %v603
        %605 = vmatmul.f32.gmra.mxu0 %v385
        %v606 = vpop.f32.mrf.mxu0
        %v607 = vadd.f32 0.0, %v606
        %608 = vmatmul.f32.gmra.mxu0 %v387
        %v609 = vpop.f32.mrf.mxu0
        %v610 = vadd.f32 0.0, %v609
        %611 = vmatmul.f32.gmra.mxu0 %v389
        %v612 = vpop.f32.mrf.mxu0
        %v613 = vadd.f32 0.0, %v612
        %614 = vmatmul.f32.gmra.mxu0 %v391
        %v615 = vpop.f32.mrf.mxu0
        %v616 = vadd.f32 0.0, %v615
        %617 = vmatmul.f32.gmra.mxu0 %v393
        %v618 = vpop.f32.mrf.mxu0
        %v619 = vadd.f32 0.0, %v618
        %620 = vmatmul.f32.gmra.mxu0 %v395
        %v621 = vpop.f32.mrf.mxu0
        %v622 = vadd.f32 0.0, %v621
        %623 = vmatmul.f32.gmra.mxu0 %v397
        %v624 = vpop.f32.mrf.mxu0
        %v625 = vadd.f32 0.0, %v624
        %626 = vmatmul.f32.gmra.mxu0 %v399
        %v627 = vpop.f32.mrf.mxu0
        %v628 = vadd.f32 0.0, %v627
        %629 = vmatmul.f32.gmra.mxu0 %v401
        %v630 = vpop.f32.mrf.mxu0
        %v631 = vadd.f32 0.0, %v630
        %632 = vmatmul.f32.gmra.mxu0 %v403
        %v633 = vpop.f32.mrf.mxu0
        %v634 = vadd.f32 0.0, %v633
        %635 = vmatmul.f32.gmra.mxu0 %v405
        %v636 = vpop.f32.mrf.mxu0
        %v637 = vadd.f32 0.0, %v636
        %638 = vmatmul.f32.gmra.mxu0 %v407
        %v639 = vpop.f32.mrf.mxu0
        %v640 = vadd.f32 0.0, %v639
        %641 = vmatmul.f32.gmra.mxu0 %v409
        %v642 = vpop.f32.mrf.mxu0
        %v643 = vadd.f32 0.0, %v642
        %644 = vmatmul.f32.gmra.mxu0 %v411
        %v645 = vpop.f32.mrf.mxu0
        %v646 = vadd.f32 0.0, %v645
        %647 = vmatmul.f32.gmra.mxu0 %v413
        %v648 = vpop.f32.mrf.mxu0
        %v649 = vadd.f32 0.0, %v648
        %650 = vmatmul.f32.gmra.mxu0 %v415
        %v651 = vpop.f32.mrf.mxu0
        %v652 = vadd.f32 0.0, %v651
        %653 = vmatmul.f32.gmra.mxu0 %v417
        %v654 = vpop.f32.mrf.mxu0
        %v655 = vadd.f32 0.0, %v654
        %656 = vmatmul.f32.gmra.mxu0 %v419
        %v657 = vpop.f32.mrf.mxu0
        %v658 = vadd.f32 0.0, %v657
        %659 = vmatmul.f32.gmra.mxu0 %v421
        %v660 = vpop.f32.mrf.mxu0
        %v661 = vadd.f32 0.0, %v660
        %662 = vmatmul.f32.gmra.mxu0 %v423
        %v663 = vpop.f32.mrf.mxu0
        %v664 = vadd.f32 0.0, %v663
        %665 = vdwg.mxu0
        %666 = vmatpush.msra.mxu0 %v551
        %667 = vmatpush.msra.mxu0 %v549
        %668 = vmatpush.msra.mxu0 %v547
        %669 = vmatpush.msra.mxu0 %v545
        %670 = vmatpush.msra.mxu0 %v543
        %671 = vmatpush.msra.mxu0 %v541
        %672 = vmatpush.msra.mxu0 %v539
        %673 = vmatpush.msra.mxu0 %v537
        %674 = vmatpush.msra.mxu0 %v535
        %675 = vmatpush.msra.mxu0 %v533
        %676 = vmatpush.msra.mxu0 %v531
        %677 = vmatpush.msra.mxu0 %v529
        %678 = vmatpush.msra.mxu0 %v527
        %679 = vmatpush.msra.mxu0 %v525
        %680 = vmatpush.msra.mxu0 %v523
        %681 = vmatpush.msra.mxu0 %v521
        %682 = vmatmul.f32.gmra.mxu0 %v362
        %v683 = vpop.f32.mrf.mxu0
        %v684 = vadd.f32 %v571, %v683
        %685 = vmatmul.f32.gmra.mxu0 %v364
        %v686 = vpop.f32.mrf.mxu0
        %v687 = vadd.f32 %v574, %v686
        %688 = vmatmul.f32.gmra.mxu0 %v366
        %v689 = vpop.f32.mrf.mxu0
        %v690 = vadd.f32 %v577, %v689
        %691 = vmatmul.f32.gmra.mxu0 %v368
        %v692 = vpop.f32.mrf.mxu0
        %v693 = vadd.f32 %v580, %v692
        %694 = vmatmul.f32.gmra.mxu0 %v370
        %v695 = vpop.f32.mrf.mxu0
        %v696 = vadd.f32 %v583, %v695
        %697 = vmatmul.f32.gmra.mxu0 %v372
        %v698 = vpop.f32.mrf.mxu0
        %v699 = vadd.f32 %v586, %v698
        %700 = vmatmul.f32.gmra.mxu0 %v374
        %v701 = vpop.f32.mrf.mxu0
        %v702 = vadd.f32 %v589, %v701
        %703 = vmatmul.f32.gmra.mxu0 %v376
        %v704 = vpop.f32.mrf.mxu0
        %v705 = vadd.f32 %v592, %v704
        %706 = vmatmul.f32.gmra.mxu0 %v378
        %v707 = vpop.f32.mrf.mxu0
        %v708 = vadd.f32 %v595, %v707
        %709 = vmatmul.f32.gmra.mxu0 %v380
        %v710 = vpop.f32.mrf.mxu0
        %v711 = vadd.f32 %v598, %v710
        %712 = vmatmul.f32.gmra.mxu0 %v382
        %v713 = vpop.f32.mrf.mxu0
        %v714 = vadd.f32 %v601, %v713
        %715 = vmatmul.f32.gmra.mxu0 %v384
        %v716 = vpop.f32.mrf.mxu0
        %v717 = vadd.f32 %v604, %v716
        %718 = vmatmul.f32.gmra.mxu0 %v386
        %v719 = vpop.f32.mrf.mxu0
        %v720 = vadd.f32 %v607, %v719
        %721 = vmatmul.f32.gmra.mxu0 %v388
        %v722 = vpop.f32.mrf.mxu0
        %v723 = vadd.f32 %v610, %v722
        %724 = vmatmul.f32.gmra.mxu0 %v390
        %v725 = vpop.f32.mrf.mxu0
        %v726 = vadd.f32 %v613, %v725
        %727 = vmatmul.f32.gmra.mxu0 %v392
        %v728 = vpop.f32.mrf.mxu0
        %v729 = vadd.f32 %v616, %v728
        %730 = vmatmul.f32.gmra.mxu0 %v394
        %v731 = vpop.f32.mrf.mxu0
        %v732 = vadd.f32 %v619, %v731
        %733 = vmatmul.f32.gmra.mxu0 %v396
        %v734 = vpop.f32.mrf.mxu0
        %v735 = vadd.f32 %v622, %v734
        %736 = vmatmul.f32.gmra.mxu0 %v398
        %v737 = vpop.f32.mrf.mxu0
        %v738 = vadd.f32 %v625, %v737
        %739 = vmatmul.f32.gmra.mxu0 %v400
        %v740 = vpop.f32.mrf.mxu0
        %v741 = vadd.f32 %v628, %v740
        %742 = vmatmul.f32.gmra.mxu0 %v402
        %v743 = vpop.f32.mrf.mxu0
        %v744 = vadd.f32 %v631, %v743
        %745 = vmatmul.f32.gmra.mxu0 %v404
        %v746 = vpop.f32.mrf.mxu0
        %v747 = vadd.f32 %v634, %v746
        %748 = vmatmul.f32.gmra.mxu0 %v406
        %v749 = vpop.f32.mrf.mxu0
        %v750 = vadd.f32 %v637, %v749
        %751 = vmatmul.f32.gmra.mxu0 %v408
        %v752 = vpop.f32.mrf.mxu0
        %v753 = vadd.f32 %v640, %v752
        %754 = vmatmul.f32.gmra.mxu0 %v410
        %v755 = vpop.f32.mrf.mxu0
        %v756 = vadd.f32 %v643, %v755
        %757 = vmatmul.f32.gmra.mxu0 %v412
        %v758 = vpop.f32.mrf.mxu0
        %v759 = vadd.f32 %v646, %v758
        %760 = vmatmul.f32.gmra.mxu0 %v414
        %v761 = vpop.f32.mrf.mxu0
        %v762 = vadd.f32 %v649, %v761
        %763 = vmatmul.f32.gmra.mxu0 %v416
        %v764 = vpop.f32.mrf.mxu0
        %v765 = vadd.f32 %v652, %v764
        %766 = vmatmul.f32.gmra.mxu0 %v418
        %v767 = vpop.f32.mrf.mxu0
        %v768 = vadd.f32 %v655, %v767
        %769 = vmatmul.f32.gmra.mxu0 %v420
        %v770 = vpop.f32.mrf.mxu0
        %v771 = vadd.f32 %v658, %v770
        %772 = vmatmul.f32.gmra.mxu0 %v422
        %v773 = vpop.f32.mrf.mxu0
        %v774 = vadd.f32 %v661, %v773
        %775 = vmatmul.f32.gmra.mxu0 %v424
        %v776 = vpop.f32.mrf.mxu0
        %v777 = vadd.f32 %v664, %v776
        %778 = vdwg.mxu0
        %779 = vmatpush.msra.mxu0 %v520
        %780 = vmatpush.msra.mxu0 %v518
        %781 = vmatpush.msra.mxu0 %v516
        %782 = vmatpush.msra.mxu0 %v514
        %783 = vmatpush.msra.mxu0 %v512
        %784 = vmatpush.msra.mxu0 %v510
        %785 = vmatpush.msra.mxu0 %v508
        %786 = vmatpush.msra.mxu0 %v506
        %787 = vmatpush.msra.mxu0 %v504
        %788 = vmatpush.msra.mxu0 %v502
        %789 = vmatpush.msra.mxu0 %v500
        %790 = vmatpush.msra.mxu0 %v498
        %791 = vmatpush.msra.mxu0 %v496
        %792 = vmatpush.msra.mxu0 %v494
        %793 = vmatpush.msra.mxu0 %v492
        %794 = vmatpush.msra.mxu0 %v490
        %795 = vmatmul.f32.gmra.mxu0 %v361
        %v796 = vpop.f32.mrf.mxu0
        %v797 = vadd.f32 0.0, %v796
        %798 = vmatmul.f32.gmra.mxu0 %v363
        %v799 = vpop.f32.mrf.mxu0
        %v800 = vadd.f32 0.0, %v799
        %801 = vmatmul.f32.gmra.mxu0 %v365
        %v802 = vpop.f32.mrf.mxu0
        %v803 = vadd.f32 0.0, %v802
        %804 = vmatmul.f32.gmra.mxu0 %v367
        %v805 = vpop.f32.mrf.mxu0
        %v806 = vadd.f32 0.0, %v805
        %807 = vmatmul.f32.gmra.mxu0 %v369
        %v808 = vpop.f32.mrf.mxu0
        %v809 = vadd.f32 0.0, %v808
        %810 = vmatmul.f32.gmra.mxu0 %v371
        %v811 = vpop.f32.mrf.mxu0
        %v812 = vadd.f32 0.0, %v811
        %813 = vmatmul.f32.gmra.mxu0 %v373
        %v814 = vpop.f32.mrf.mxu0
        %v815 = vadd.f32 0.0, %v814
        %816 = vmatmul.f32.gmra.mxu0 %v375
        %v817 = vpop.f32.mrf.mxu0
        %v818 = vadd.f32 0.0, %v817
        %819 = vmatmul.f32.gmra.mxu0 %v377
        %v820 = vpop.f32.mrf.mxu0
        %v821 = vadd.f32 0.0, %v820
        %822 = vmatmul.f32.gmra.mxu0 %v379
        %v823 = vpop.f32.mrf.mxu0
        %v824 = vadd.f32 0.0, %v823
        %825 = vmatmul.f32.gmra.mxu0 %v381
        %v826 = vpop.f32.mrf.mxu0
        %v827 = vadd.f32 0.0, %v826
        %828 = vmatmul.f32.gmra.mxu0 %v383
        %v829 = vpop.f32.mrf.mxu0
        %v830 = vadd.f32 0.0, %v829
        %831 = vmatmul.f32.gmra.mxu0 %v385
        %v832 = vpop.f32.mrf.mxu0
        %v833 = vadd.f32 0.0, %v832
        %834 = vmatmul.f32.gmra.mxu0 %v387
        %v835 = vpop.f32.mrf.mxu0
        %v836 = vadd.f32 0.0, %v835
        %837 = vmatmul.f32.gmra.mxu0 %v389
        %v838 = vpop.f32.mrf.mxu0
        %v839 = vadd.f32 0.0, %v838
        %840 = vmatmul.f32.gmra.mxu0 %v391
        %v841 = vpop.f32.mrf.mxu0
        %v842 = vadd.f32 0.0, %v841
        %843 = vmatmul.f32.gmra.mxu0 %v393
        %v844 = vpop.f32.mrf.mxu0
        %v845 = vadd.f32 0.0, %v844
        %846 = vmatmul.f32.gmra.mxu0 %v395
        %v847 = vpop.f32.mrf.mxu0
        %v848 = vadd.f32 0.0, %v847
        %849 = vmatmul.f32.gmra.mxu0 %v397
        %v850 = vpop.f32.mrf.mxu0
        %v851 = vadd.f32 0.0, %v850
        %852 = vmatmul.f32.gmra.mxu0 %v399
        %v853 = vpop.f32.mrf.mxu0
        %v854 = vadd.f32 0.0, %v853
        %855 = vmatmul.f32.gmra.mxu0 %v401
        %v856 = vpop.f32.mrf.mxu0
        %v857 = vadd.f32 0.0, %v856
        %858 = vmatmul.f32.gmra.mxu0 %v403
        %v859 = vpop.f32.mrf.mxu0
        %v860 = vadd.f32 0.0, %v859
        %861 = vmatmul.f32.gmra.mxu0 %v405
        %v862 = vpop.f32.mrf.mxu0
        %v863 = vadd.f32 0.0, %v862
        %864 = vmatmul.f32.gmra.mxu0 %v407
        %v865 = vpop.f32.mrf.mxu0
        %v866 = vadd.f32 0.0, %v865
        %867 = vmatmul.f32.gmra.mxu0 %v409
        %v868 = vpop.f32.mrf.mxu0
        %v869 = vadd.f32 0.0, %v868
        %870 = vmatmul.f32.gmra.mxu0 %v411
        %v871 = vpop.f32.mrf.mxu0
        %v872 = vadd.f32 0.0, %v871
        %873 = vmatmul.f32.gmra.mxu0 %v413
        %v874 = vpop.f32.mrf.mxu0
        %v875 = vadd.f32 0.0, %v874
        %876 = vmatmul.f32.gmra.mxu0 %v415
        %v877 = vpop.f32.mrf.mxu0
        %v878 = vadd.f32 0.0, %v877
        %879 = vmatmul.f32.gmra.mxu0 %v417
        %v880 = vpop.f32.mrf.mxu0
        %v881 = vadd.f32 0.0, %v880
        %882 = vmatmul.f32.gmra.mxu0 %v419
        %v883 = vpop.f32.mrf.mxu0
        %v884 = vadd.f32 0.0, %v883
        %885 = vmatmul.f32.gmra.mxu0 %v421
        %v886 = vpop.f32.mrf.mxu0
        %v887 = vadd.f32 0.0, %v886
        %888 = vmatmul.f32.gmra.mxu0 %v423
        %v889 = vpop.f32.mrf.mxu0
        %v890 = vadd.f32 0.0, %v889
        %891 = vdwg.mxu0
        %892 = vmatpush.msra.mxu0 %v552
        %893 = vmatpush.msra.mxu0 %v550
        %894 = vmatpush.msra.mxu0 %v548
        %895 = vmatpush.msra.mxu0 %v546
        %896 = vmatpush.msra.mxu0 %v544
        %897 = vmatpush.msra.mxu0 %v542
        %898 = vmatpush.msra.mxu0 %v540
        %899 = vmatpush.msra.mxu0 %v538
        %900 = vmatpush.msra.mxu0 %v536
        %901 = vmatpush.msra.mxu0 %v534
        %902 = vmatpush.msra.mxu0 %v532
        %903 = vmatpush.msra.mxu0 %v530
        %904 = vmatpush.msra.mxu0 %v528
        %905 = vmatpush.msra.mxu0 %v526
        %906 = vmatpush.msra.mxu0 %v524
        %907 = vmatpush.msra.mxu0 %v522
        %908 = vmatmul.f32.gmra.mxu0 %v362
        %v909 = vpop.f32.mrf.mxu0
        %v910 = vadd.f32 %v797, %v909
        %911 = vmatmul.f32.gmra.mxu0 %v364
        %v912 = vpop.f32.mrf.mxu0
        %v913 = vadd.f32 %v800, %v912
        %914 = vmatmul.f32.gmra.mxu0 %v366
        %v915 = vpop.f32.mrf.mxu0
        %v916 = vadd.f32 %v803, %v915
        %917 = vmatmul.f32.gmra.mxu0 %v368
        %v918 = vpop.f32.mrf.mxu0
        %v919 = vadd.f32 %v806, %v918
        %920 = vmatmul.f32.gmra.mxu0 %v370
        %v921 = vpop.f32.mrf.mxu0
        %v922 = vadd.f32 %v809, %v921
        %923 = vmatmul.f32.gmra.mxu0 %v372
        %v924 = vpop.f32.mrf.mxu0
        %v925 = vadd.f32 %v812, %v924
        %926 = vmatmul.f32.gmra.mxu0 %v374
        %v927 = vpop.f32.mrf.mxu0
        %v928 = vadd.f32 %v815, %v927
        %929 = vmatmul.f32.gmra.mxu0 %v376
        %v930 = vpop.f32.mrf.mxu0
        %v931 = vadd.f32 %v818, %v930
        %932 = vmatmul.f32.gmra.mxu0 %v378
        %v933 = vpop.f32.mrf.mxu0
        %v934 = vadd.f32 %v821, %v933
        %935 = vmatmul.f32.gmra.mxu0 %v380
        %v936 = vpop.f32.mrf.mxu0
        %v937 = vadd.f32 %v824, %v936
        %938 = vmatmul.f32.gmra.mxu0 %v382
        %v939 = vpop.f32.mrf.mxu0
        %v940 = vadd.f32 %v827, %v939
        %941 = vmatmul.f32.gmra.mxu0 %v384
        %v942 = vpop.f32.mrf.mxu0
        %v943 = vadd.f32 %v830, %v942
        %944 = vmatmul.f32.gmra.mxu0 %v386
        %v945 = vpop.f32.mrf.mxu0
        %v946 = vadd.f32 %v833, %v945
        %947 = vmatmul.f32.gmra.mxu0 %v388
        %v948 = vpop.f32.mrf.mxu0
        %v949 = vadd.f32 %v836, %v948
        %950 = vmatmul.f32.gmra.mxu0 %v390
        %v951 = vpop.f32.mrf.mxu0
        %v952 = vadd.f32 %v839, %v951
        %953 = vmatmul.f32.gmra.mxu0 %v392
        %v954 = vpop.f32.mrf.mxu0
        %v955 = vadd.f32 %v842, %v954
        %956 = vmatmul.f32.gmra.mxu0 %v394
        %v957 = vpop.f32.mrf.mxu0
        %v958 = vadd.f32 %v845, %v957
        %959 = vmatmul.f32.gmra.mxu0 %v396
        %v960 = vpop.f32.mrf.mxu0
        %v961 = vadd.f32 %v848, %v960
        %962 = vmatmul.f32.gmra.mxu0 %v398
        %v963 = vpop.f32.mrf.mxu0
        %v964 = vadd.f32 %v851, %v963
        %965 = vmatmul.f32.gmra.mxu0 %v400
        %v966 = vpop.f32.mrf.mxu0
        %v967 = vadd.f32 %v854, %v966
        %968 = vmatmul.f32.gmra.mxu0 %v402
        %v969 = vpop.f32.mrf.mxu0
        %v970 = vadd.f32 %v857, %v969
        %971 = vmatmul.f32.gmra.mxu0 %v404
        %v972 = vpop.f32.mrf.mxu0
        %v973 = vadd.f32 %v860, %v972
        %974 = vmatmul.f32.gmra.mxu0 %v406
        %v975 = vpop.f32.mrf.mxu0
        %v976 = vadd.f32 %v863, %v975
        %977 = vmatmul.f32.gmra.mxu0 %v408
        %v978 = vpop.f32.mrf.mxu0
        %v979 = vadd.f32 %v866, %v978
        %980 = vmatmul.f32.gmra.mxu0 %v410
        %v981 = vpop.f32.mrf.mxu0
        %v982 = vadd.f32 %v869, %v981
        %983 = vmatmul.f32.gmra.mxu0 %v412
        %v984 = vpop.f32.mrf.mxu0
        %v985 = vadd.f32 %v872, %v984
        %986 = vmatmul.f32.gmra.mxu0 %v414
        %v987 = vpop.f32.mrf.mxu0
        %v988 = vadd.f32 %v875, %v987
        %989 = vmatmul.f32.gmra.mxu0 %v416
        %v990 = vpop.f32.mrf.mxu0
        %v991 = vadd.f32 %v878, %v990
        %992 = vmatmul.f32.gmra.mxu0 %v418
        %v993 = vpop.f32.mrf.mxu0
        %v994 = vadd.f32 %v881, %v993
        %995 = vmatmul.f32.gmra.mxu0 %v420
        %v996 = vpop.f32.mrf.mxu0
        %v997 = vadd.f32 %v884, %v996
        %998 = vmatmul.f32.gmra.mxu0 %v422
        %v999 = vpop.f32.mrf.mxu0
        %v1000 = vadd.f32 %v887, %v999
        %1001 = vmatmul.f32.gmra.mxu0 %v424
        %v1002 = vpop.f32.mrf.mxu0
        %v1003 = vadd.f32 %v890, %v1002
        %1004 = vdwg.mxu0
        %v1005 = vld [vmem:[#allocation8] sm:$0xff]
        %v1006 = vld [vmem:[#allocation8 + $0x8] sm:$0xff]
        %v1007 = vld [vmem:[#allocation8 + $0x10] sm:$0xff]
        %v1008 = vld [vmem:[#allocation8 + $0x18] sm:$0xff]
        %v1009 = vld [vmem:[#allocation8 + $0x20] sm:$0xff]
        %v1010 = vld [vmem:[#allocation8 + $0x28] sm:$0xff]
        %v1011 = vld [vmem:[#allocation8 + $0x30] sm:$0xff]
        %v1012 = vld [vmem:[#allocation8 + $0x38] sm:$0xff]
        %v1013 = vld [vmem:[#allocation8 + $0x40] sm:$0xff]
        %v1014 = vld [vmem:[#allocation8 + $0x48] sm:$0xff]
        %v1015 = vld [vmem:[#allocation8 + $0x50] sm:$0xff]
        %v1016 = vld [vmem:[#allocation8 + $0x58] sm:$0xff]
        %v1017 = vld [vmem:[#allocation8 + $0x60] sm:$0xff]
        %v1018 = vld [vmem:[#allocation8 + $0x68] sm:$0xff]
        %v1019 = vld [vmem:[#allocation8 + $0x70] sm:$0xff]
        %v1020 = vld [vmem:[#allocation8 + $0x78] sm:$0xff]
        %v1021 = vld [vmem:[#allocation8 + $0x80] sm:$0xff]
        %v1022 = vld [vmem:[#allocation8 + $0x88] sm:$0xff]
        %v1023 = vld [vmem:[#allocation8 + $0x90] sm:$0xff]
        %v1024 = vld [vmem:[#allocation8 + $0x98] sm:$0xff]
        %v1025 = vld [vmem:[#allocation8 + $0xa0] sm:$0xff]
        %v1026 = vld [vmem:[#allocation8 + $0xa8] sm:$0xff]
        %v1027 = vld [vmem:[#allocation8 + $0xb0] sm:$0xff]
        %v1028 = vld [vmem:[#allocation8 + $0xb8] sm:$0xff]
        %v1029 = vld [vmem:[#allocation8 + $0xc0] sm:$0xff]
        %v1030 = vld [vmem:[#allocation8 + $0xc8] sm:$0xff]
        %v1031 = vld [vmem:[#allocation8 + $0xd0] sm:$0xff]
        %v1032 = vld [vmem:[#allocation8 + $0xd8] sm:$0xff]
        %v1033 = vld [vmem:[#allocation8 + $0xe0] sm:$0xff]
        %v1034 = vld [vmem:[#allocation8 + $0xe8] sm:$0xff]
        %v1035 = vld [vmem:[#allocation8 + $0xf0] sm:$0xff]
        %v1036 = vld [vmem:[#allocation8 + $0xf8] sm:$0xff]
        %v1037 = vld [vmem:[#allocation8 + $0x100] sm:$0xff]
        %v1038 = vld [vmem:[#allocation8 + $0x108] sm:$0xff]
        %v1039 = vld [vmem:[#allocation8 + $0x110] sm:$0xff]
        %v1040 = vld [vmem:[#allocation8 + $0x118] sm:$0xff]
        %v1041 = vld [vmem:[#allocation8 + $0x120] sm:$0xff]
        %v1042 = vld [vmem:[#allocation8 + $0x128] sm:$0xff]
        %v1043 = vld [vmem:[#allocation8 + $0x130] sm:$0xff]
        %v1044 = vld [vmem:[#allocation8 + $0x138] sm:$0xff]
        %v1045 = vld [vmem:[#allocation8 + $0x140] sm:$0xff]
        %v1046 = vld [vmem:[#allocation8 + $0x148] sm:$0xff]
        %v1047 = vld [vmem:[#allocation8 + $0x150] sm:$0xff]
        %v1048 = vld [vmem:[#allocation8 + $0x158] sm:$0xff]
        %v1049 = vld [vmem:[#allocation8 + $0x160] sm:$0xff]
        %v1050 = vld [vmem:[#allocation8 + $0x168] sm:$0xff]
        %v1051 = vld [vmem:[#allocation8 + $0x170] sm:$0xff]
        %v1052 = vld [vmem:[#allocation8 + $0x178] sm:$0xff]
        %v1053 = vld [vmem:[#allocation8 + $0x180] sm:$0xff]
        %v1054 = vld [vmem:[#allocation8 + $0x188] sm:$0xff]
        %v1055 = vld [vmem:[#allocation8 + $0x190] sm:$0xff]
        %v1056 = vld [vmem:[#allocation8 + $0x198] sm:$0xff]
        %v1057 = vld [vmem:[#allocation8 + $0x1a0] sm:$0xff]
        %v1058 = vld [vmem:[#allocation8 + $0x1a8] sm:$0xff]
        %v1059 = vld [vmem:[#allocation8 + $0x1b0] sm:$0xff]
        %v1060 = vld [vmem:[#allocation8 + $0x1b8] sm:$0xff]
        %v1061 = vld [vmem:[#allocation8 + $0x1c0] sm:$0xff]
        %v1062 = vld [vmem:[#allocation8 + $0x1c8] sm:$0xff]
        %v1063 = vld [vmem:[#allocation8 + $0x1d0] sm:$0xff]
        %v1064 = vld [vmem:[#allocation8 + $0x1d8] sm:$0xff]
        %v1065 = vld [vmem:[#allocation8 + $0x1e0] sm:$0xff]
        %v1066 = vld [vmem:[#allocation8 + $0x1e8] sm:$0xff]
        %v1067 = vld [vmem:[#allocation8 + $0x1f0] sm:$0xff]
        %v1068 = vld [vmem:[#allocation8 + $0x1f8] sm:$0xff]
        %1069 = vmatpush.msra.mxu0 %v1035
        %1070 = vmatpush.msra.mxu0 %v1033
        %1071 = vmatpush.msra.mxu0 %v1031
        %1072 = vmatpush.msra.mxu0 %v1029
        %1073 = vmatpush.msra.mxu0 %v1027
        %1074 = vmatpush.msra.mxu0 %v1025
        %1075 = vmatpush.msra.mxu0 %v1023
        %1076 = vmatpush.msra.mxu0 %v1021
        %1077 = vmatpush.msra.mxu0 %v1019
        %1078 = vmatpush.msra.mxu0 %v1017
        %1079 = vmatpush.msra.mxu0 %v1015
        %1080 = vmatpush.msra.mxu0 %v1013
        %1081 = vmatpush.msra.mxu0 %v1011
        %1082 = vmatpush.msra.mxu0 %v1009
        %1083 = vmatpush.msra.mxu0 %v1007
        %1084 = vmatpush.msra.mxu0 %v1005
        %1085 = vmatmul.f32.gmra.mxu0 %v425
        %v1086 = vpop.f32.mrf.mxu0
        %v1087 = vadd.f32 0.0, %v1086
        %1088 = vmatmul.f32.gmra.mxu0 %v427
        %v1089 = vpop.f32.mrf.mxu0
        %v1090 = vadd.f32 0.0, %v1089
        %1091 = vmatmul.f32.gmra.mxu0 %v429
        %v1092 = vpop.f32.mrf.mxu0
        %v1093 = vadd.f32 0.0, %v1092
        %1094 = vmatmul.f32.gmra.mxu0 %v431
        %v1095 = vpop.f32.mrf.mxu0
        %v1096 = vadd.f32 0.0, %v1095
        %1097 = vmatmul.f32.gmra.mxu0 %v433
        %v1098 = vpop.f32.mrf.mxu0
        %v1099 = vadd.f32 0.0, %v1098
        %1100 = vmatmul.f32.gmra.mxu0 %v435
        %v1101 = vpop.f32.mrf.mxu0
        %v1102 = vadd.f32 0.0, %v1101
        %1103 = vmatmul.f32.gmra.mxu0 %v437
        %v1104 = vpop.f32.mrf.mxu0
        %v1105 = vadd.f32 0.0, %v1104
        %1106 = vmatmul.f32.gmra.mxu0 %v439
        %v1107 = vpop.f32.mrf.mxu0
        %v1108 = vadd.f32 0.0, %v1107
        %1109 = vmatmul.f32.gmra.mxu0 %v441
        %v1110 = vpop.f32.mrf.mxu0
        %v1111 = vadd.f32 0.0, %v1110
        %1112 = vmatmul.f32.gmra.mxu0 %v443
        %v1113 = vpop.f32.mrf.mxu0
        %v1114 = vadd.f32 0.0, %v1113
        %1115 = vmatmul.f32.gmra.mxu0 %v445
        %v1116 = vpop.f32.mrf.mxu0
        %v1117 = vadd.f32 0.0, %v1116
        %1118 = vmatmul.f32.gmra.mxu0 %v447
        %v1119 = vpop.f32.mrf.mxu0
        %v1120 = vadd.f32 0.0, %v1119
        %1121 = vmatmul.f32.gmra.mxu0 %v449
        %v1122 = vpop.f32.mrf.mxu0
        %v1123 = vadd.f32 0.0, %v1122
        %1124 = vmatmul.f32.gmra.mxu0 %v451
        %v1125 = vpop.f32.mrf.mxu0
        %v1126 = vadd.f32 0.0, %v1125
        %1127 = vmatmul.f32.gmra.mxu0 %v453
        %v1128 = vpop.f32.mrf.mxu0
        %v1129 = vadd.f32 0.0, %v1128
        %1130 = vmatmul.f32.gmra.mxu0 %v455
        %v1131 = vpop.f32.mrf.mxu0
        %v1132 = vadd.f32 0.0, %v1131
        %1133 = vmatmul.f32.gmra.mxu0 %v457
        %v1134 = vpop.f32.mrf.mxu0
        %v1135 = vadd.f32 0.0, %v1134
        %1136 = vmatmul.f32.gmra.mxu0 %v459
        %v1137 = vpop.f32.mrf.mxu0
        %v1138 = vadd.f32 0.0, %v1137
        %1139 = vmatmul.f32.gmra.mxu0 %v461
        %v1140 = vpop.f32.mrf.mxu0
        %v1141 = vadd.f32 0.0, %v1140
        %1142 = vmatmul.f32.gmra.mxu0 %v463
        %v1143 = vpop.f32.mrf.mxu0
        %v1144 = vadd.f32 0.0, %v1143
        %1145 = vmatmul.f32.gmra.mxu0 %v465
        %v1146 = vpop.f32.mrf.mxu0
        %v1147 = vadd.f32 0.0, %v1146
        %1148 = vmatmul.f32.gmra.mxu0 %v467
        %v1149 = vpop.f32.mrf.mxu0
        %v1150 = vadd.f32 0.0, %v1149
        %1151 = vmatmul.f32.gmra.mxu0 %v469
        %v1152 = vpop.f32.mrf.mxu0
        %v1153 = vadd.f32 0.0, %v1152
        %1154 = vmatmul.f32.gmra.mxu0 %v471
        %v1155 = vpop.f32.mrf.mxu0
        %v1156 = vadd.f32 0.0, %v1155
        %1157 = vmatmul.f32.gmra.mxu0 %v473
        %v1158 = vpop.f32.mrf.mxu0
        %v1159 = vadd.f32 0.0, %v1158
        %1160 = vmatmul.f32.gmra.mxu0 %v475
        %v1161 = vpop.f32.mrf.mxu0
        %v1162 = vadd.f32 0.0, %v1161
        %1163 = vmatmul.f32.gmra.mxu0 %v477
        %v1164 = vpop.f32.mrf.mxu0
        %v1165 = vadd.f32 0.0, %v1164
        %1166 = vmatmul.f32.gmra.mxu0 %v479
        %v1167 = vpop.f32.mrf.mxu0
        %v1168 = vadd.f32 0.0, %v1167
        %1169 = vmatmul.f32.gmra.mxu0 %v481
        %v1170 = vpop.f32.mrf.mxu0
        %v1171 = vadd.f32 0.0, %v1170
        %1172 = vmatmul.f32.gmra.mxu0 %v483
        %v1173 = vpop.f32.mrf.mxu0
        %v1174 = vadd.f32 0.0, %v1173
        %1175 = vmatmul.f32.gmra.mxu0 %v485
        %v1176 = vpop.f32.mrf.mxu0
        %v1177 = vadd.f32 0.0, %v1176
        %1178 = vmatmul.f32.gmra.mxu0 %v487
        %v1179 = vpop.f32.mrf.mxu0
        %v1180 = vadd.f32 0.0, %v1179
        %1181 = vdwg.mxu0
        %1182 = vmatpush.msra.mxu0 %v1067
        %1183 = vmatpush.msra.mxu0 %v1065
        %1184 = vmatpush.msra.mxu0 %v1063
        %1185 = vmatpush.msra.mxu0 %v1061
        %1186 = vmatpush.msra.mxu0 %v1059
        %1187 = vmatpush.msra.mxu0 %v1057
        %1188 = vmatpush.msra.mxu0 %v1055
        %1189 = vmatpush.msra.mxu0 %v1053
        %1190 = vmatpush.msra.mxu0 %v1051
        %1191 = vmatpush.msra.mxu0 %v1049
        %1192 = vmatpush.msra.mxu0 %v1047
        %1193 = vmatpush.msra.mxu0 %v1045
        %1194 = vmatpush.msra.mxu0 %v1043
        %1195 = vmatpush.msra.mxu0 %v1041
        %1196 = vmatpush.msra.mxu0 %v1039
        %1197 = vmatpush.msra.mxu0 %v1037
        %1198 = vmatmul.f32.gmra.mxu0 %v426
        %v1199 = vpop.f32.mrf.mxu0
        %v1200 = vadd.f32 %v1087, %v1199
        %1201 = vmatmul.f32.gmra.mxu0 %v428
        %v1202 = vpop.f32.mrf.mxu0
        %v1203 = vadd.f32 %v1090, %v1202
        %1204 = vmatmul.f32.gmra.mxu0 %v430
        %v1205 = vpop.f32.mrf.mxu0
        %v1206 = vadd.f32 %v1093, %v1205
        %1207 = vmatmul.f32.gmra.mxu0 %v432
        %v1208 = vpop.f32.mrf.mxu0
        %v1209 = vadd.f32 %v1096, %v1208
        %1210 = vmatmul.f32.gmra.mxu0 %v434
        %v1211 = vpop.f32.mrf.mxu0
        %v1212 = vadd.f32 %v1099, %v1211
        %1213 = vmatmul.f32.gmra.mxu0 %v436
        %v1214 = vpop.f32.mrf.mxu0
        %v1215 = vadd.f32 %v1102, %v1214
        %1216 = vmatmul.f32.gmra.mxu0 %v438
        %v1217 = vpop.f32.mrf.mxu0
        %v1218 = vadd.f32 %v1105, %v1217
        %1219 = vmatmul.f32.gmra.mxu0 %v440
        %v1220 = vpop.f32.mrf.mxu0
        %v1221 = vadd.f32 %v1108, %v1220
        %1222 = vmatmul.f32.gmra.mxu0 %v442
        %v1223 = vpop.f32.mrf.mxu0
        %v1224 = vadd.f32 %v1111, %v1223
        %1225 = vmatmul.f32.gmra.mxu0 %v444
        %v1226 = vpop.f32.mrf.mxu0
        %v1227 = vadd.f32 %v1114, %v1226
        %1228 = vmatmul.f32.gmra.mxu0 %v446
        %v1229 = vpop.f32.mrf.mxu0
        %v1230 = vadd.f32 %v1117, %v1229
        %1231 = vmatmul.f32.gmra.mxu0 %v448
        %v1232 = vpop.f32.mrf.mxu0
        %v1233 = vadd.f32 %v1120, %v1232
        %1234 = vmatmul.f32.gmra.mxu0 %v450
        %v1235 = vpop.f32.mrf.mxu0
        %v1236 = vadd.f32 %v1123, %v1235
        %1237 = vmatmul.f32.gmra.mxu0 %v452
        %v1238 = vpop.f32.mrf.mxu0
        %v1239 = vadd.f32 %v1126, %v1238
        %1240 = vmatmul.f32.gmra.mxu0 %v454
        %v1241 = vpop.f32.mrf.mxu0
        %v1242 = vadd.f32 %v1129, %v1241
        %1243 = vmatmul.f32.gmra.mxu0 %v456
        %v1244 = vpop.f32.mrf.mxu0
        %v1245 = vadd.f32 %v1132, %v1244
        %1246 = vmatmul.f32.gmra.mxu0 %v458
        %v1247 = vpop.f32.mrf.mxu0
        %v1248 = vadd.f32 %v1135, %v1247
        %1249 = vmatmul.f32.gmra.mxu0 %v460
        %v1250 = vpop.f32.mrf.mxu0
        %v1251 = vadd.f32 %v1138, %v1250
        %1252 = vmatmul.f32.gmra.mxu0 %v462
        %v1253 = vpop.f32.mrf.mxu0
        %v1254 = vadd.f32 %v1141, %v1253
        %1255 = vmatmul.f32.gmra.mxu0 %v464
        %v1256 = vpop.f32.mrf.mxu0
        %v1257 = vadd.f32 %v1144, %v1256
        %1258 = vmatmul.f32.gmra.mxu0 %v466
        %v1259 = vpop.f32.mrf.mxu0
        %v1260 = vadd.f32 %v1147, %v1259
        %1261 = vmatmul.f32.gmra.mxu0 %v468
        %v1262 = vpop.f32.mrf.mxu0
        %v1263 = vadd.f32 %v1150, %v1262
        %1264 = vmatmul.f32.gmra.mxu0 %v470
        %v1265 = vpop.f32.mrf.mxu0
        %v1266 = vadd.f32 %v1153, %v1265
        %1267 = vmatmul.f32.gmra.mxu0 %v472
        %v1268 = vpop.f32.mrf.mxu0
        %v1269 = vadd.f32 %v1156, %v1268
        %1270 = vmatmul.f32.gmra.mxu0 %v474
        %v1271 = vpop.f32.mrf.mxu0
        %v1272 = vadd.f32 %v1159, %v1271
        %1273 = vmatmul.f32.gmra.mxu0 %v476
        %v1274 = vpop.f32.mrf.mxu0
        %v1275 = vadd.f32 %v1162, %v1274
        %1276 = vmatmul.f32.gmra.mxu0 %v478
        %v1277 = vpop.f32.mrf.mxu0
        %v1278 = vadd.f32 %v1165, %v1277
        %1279 = vmatmul.f32.gmra.mxu0 %v480
        %v1280 = vpop.f32.mrf.mxu0
        %v1281 = vadd.f32 %v1168, %v1280
        %1282 = vmatmul.f32.gmra.mxu0 %v482
        %v1283 = vpop.f32.mrf.mxu0
        %v1284 = vadd.f32 %v1171, %v1283
        %1285 = vmatmul.f32.gmra.mxu0 %v484
        %v1286 = vpop.f32.mrf.mxu0
        %v1287 = vadd.f32 %v1174, %v1286
        %1288 = vmatmul.f32.gmra.mxu0 %v486
        %v1289 = vpop.f32.mrf.mxu0
        %v1290 = vadd.f32 %v1177, %v1289
        %1291 = vmatmul.f32.gmra.mxu0 %v488
        %v1292 = vpop.f32.mrf.mxu0
        %v1293 = vadd.f32 %v1180, %v1292
        %1294 = vdwg.mxu0
        %1295 = vmatpush.msra.mxu0 %v1036
        %1296 = vmatpush.msra.mxu0 %v1034
        %1297 = vmatpush.msra.mxu0 %v1032
        %1298 = vmatpush.msra.mxu0 %v1030
        %1299 = vmatpush.msra.mxu0 %v1028
        %1300 = vmatpush.msra.mxu0 %v1026
        %1301 = vmatpush.msra.mxu0 %v1024
        %1302 = vmatpush.msra.mxu0 %v1022
        %1303 = vmatpush.msra.mxu0 %v1020
        %1304 = vmatpush.msra.mxu0 %v1018
        %1305 = vmatpush.msra.mxu0 %v1016
        %1306 = vmatpush.msra.mxu0 %v1014
        %1307 = vmatpush.msra.mxu0 %v1012
        %1308 = vmatpush.msra.mxu0 %v1010
        %1309 = vmatpush.msra.mxu0 %v1008
        %1310 = vmatpush.msra.mxu0 %v1006
        %1311 = vmatmul.f32.gmra.mxu0 %v425
        %v1312 = vpop.f32.mrf.mxu0
        %v1313 = vadd.f32 0.0, %v1312
        %1314 = vmatmul.f32.gmra.mxu0 %v427
        %v1315 = vpop.f32.mrf.mxu0
        %v1316 = vadd.f32 0.0, %v1315
        %1317 = vmatmul.f32.gmra.mxu0 %v429
        %v1318 = vpop.f32.mrf.mxu0
        %v1319 = vadd.f32 0.0, %v1318
        %1320 = vmatmul.f32.gmra.mxu0 %v431
        %v1321 = vpop.f32.mrf.mxu0
        %v1322 = vadd.f32 0.0, %v1321
        %1323 = vmatmul.f32.gmra.mxu0 %v433
        %v1324 = vpop.f32.mrf.mxu0
        %v1325 = vadd.f32 0.0, %v1324
        %1326 = vmatmul.f32.gmra.mxu0 %v435
        %v1327 = vpop.f32.mrf.mxu0
        %v1328 = vadd.f32 0.0, %v1327
        %1329 = vmatmul.f32.gmra.mxu0 %v437
        %v1330 = vpop.f32.mrf.mxu0
        %v1331 = vadd.f32 0.0, %v1330
        %1332 = vmatmul.f32.gmra.mxu0 %v439
        %v1333 = vpop.f32.mrf.mxu0
        %v1334 = vadd.f32 0.0, %v1333
        %1335 = vmatmul.f32.gmra.mxu0 %v441
        %v1336 = vpop.f32.mrf.mxu0
        %v1337 = vadd.f32 0.0, %v1336
        %1338 = vmatmul.f32.gmra.mxu0 %v443
        %v1339 = vpop.f32.mrf.mxu0
        %v1340 = vadd.f32 0.0, %v1339
        %1341 = vmatmul.f32.gmra.mxu0 %v445
        %v1342 = vpop.f32.mrf.mxu0
        %v1343 = vadd.f32 0.0, %v1342
        %1344 = vmatmul.f32.gmra.mxu0 %v447
        %v1345 = vpop.f32.mrf.mxu0
        %v1346 = vadd.f32 0.0, %v1345
        %1347 = vmatmul.f32.gmra.mxu0 %v449
        %v1348 = vpop.f32.mrf.mxu0
        %v1349 = vadd.f32 0.0, %v1348
        %1350 = vmatmul.f32.gmra.mxu0 %v451
        %v1351 = vpop.f32.mrf.mxu0
        %v1352 = vadd.f32 0.0, %v1351
        %1353 = vmatmul.f32.gmra.mxu0 %v453
        %v1354 = vpop.f32.mrf.mxu0
        %v1355 = vadd.f32 0.0, %v1354
        %1356 = vmatmul.f32.gmra.mxu0 %v455
        %v1357 = vpop.f32.mrf.mxu0
        %v1358 = vadd.f32 0.0, %v1357
        %1359 = vmatmul.f32.gmra.mxu0 %v457
        %v1360 = vpop.f32.mrf.mxu0
        %v1361 = vadd.f32 0.0, %v1360
        %1362 = vmatmul.f32.gmra.mxu0 %v459
        %v1363 = vpop.f32.mrf.mxu0
        %v1364 = vadd.f32 0.0, %v1363
        %1365 = vmatmul.f32.gmra.mxu0 %v461
        %v1366 = vpop.f32.mrf.mxu0
        %v1367 = vadd.f32 0.0, %v1366
        %1368 = vmatmul.f32.gmra.mxu0 %v463
        %v1369 = vpop.f32.mrf.mxu0
        %v1370 = vadd.f32 0.0, %v1369
        %1371 = vmatmul.f32.gmra.mxu0 %v465
        %v1372 = vpop.f32.mrf.mxu0
        %v1373 = vadd.f32 0.0, %v1372
        %1374 = vmatmul.f32.gmra.mxu0 %v467
        %v1375 = vpop.f32.mrf.mxu0
        %v1376 = vadd.f32 0.0, %v1375
        %1377 = vmatmul.f32.gmra.mxu0 %v469
        %v1378 = vpop.f32.mrf.mxu0
        %v1379 = vadd.f32 0.0, %v1378
        %1380 = vmatmul.f32.gmra.mxu0 %v471
        %v1381 = vpop.f32.mrf.mxu0
        %v1382 = vadd.f32 0.0, %v1381
        %1383 = vmatmul.f32.gmra.mxu0 %v473
        %v1384 = vpop.f32.mrf.mxu0
        %v1385 = vadd.f32 0.0, %v1384
        %1386 = vmatmul.f32.gmra.mxu0 %v475
        %v1387 = vpop.f32.mrf.mxu0
        %v1388 = vadd.f32 0.0, %v1387
        %1389 = vmatmul.f32.gmra.mxu0 %v477
        %v1390 = vpop.f32.mrf.mxu0
        %v1391 = vadd.f32 0.0, %v1390
        %1392 = vmatmul.f32.gmra.mxu0 %v479
        %v1393 = vpop.f32.mrf.mxu0
        %v1394 = vadd.f32 0.0, %v1393
        %1395 = vmatmul.f32.gmra.mxu0 %v481
        %v1396 = vpop.f32.mrf.mxu0
        %v1397 = vadd.f32 0.0, %v1396
        %1398 = vmatmul.f32.gmra.mxu0 %v483
        %v1399 = vpop.f32.mrf.mxu0
        %v1400 = vadd.f32 0.0, %v1399
        %1401 = vmatmul.f32.gmra.mxu0 %v485
        %v1402 = vpop.f32.mrf.mxu0
        %v1403 = vadd.f32 0.0, %v1402
        %1404 = vmatmul.f32.gmra.mxu0 %v487
        %v1405 = vpop.f32.mrf.mxu0
        %v1406 = vadd.f32 0.0, %v1405
        %1407 = vdwg.mxu0
        %1408 = vmatpush.msra.mxu0 %v1068
        %1409 = vmatpush.msra.mxu0 %v1066
        %1410 = vmatpush.msra.mxu0 %v1064
        %1411 = vmatpush.msra.mxu0 %v1062
        %1412 = vmatpush.msra.mxu0 %v1060
        %1413 = vmatpush.msra.mxu0 %v1058
        %1414 = vmatpush.msra.mxu0 %v1056
        %1415 = vmatpush.msra.mxu0 %v1054
        %1416 = vmatpush.msra.mxu0 %v1052
        %1417 = vmatpush.msra.mxu0 %v1050
        %1418 = vmatpush.msra.mxu0 %v1048
        %1419 = vmatpush.msra.mxu0 %v1046
        %1420 = vmatpush.msra.mxu0 %v1044
        %1421 = vmatpush.msra.mxu0 %v1042
        %1422 = vmatpush.msra.mxu0 %v1040
        %1423 = vmatpush.msra.mxu0 %v1038
        %1424 = vmatmul.f32.gmra.mxu0 %v426
        %v1425 = vpop.f32.mrf.mxu0
        %v1426 = vadd.f32 %v1313, %v1425
        %1427 = vmatmul.f32.gmra.mxu0 %v428
        %v1428 = vpop.f32.mrf.mxu0
        %v1429 = vadd.f32 %v1316, %v1428
        %1430 = vmatmul.f32.gmra.mxu0 %v430
        %v1431 = vpop.f32.mrf.mxu0
        %v1432 = vadd.f32 %v1319, %v1431
        %1433 = vmatmul.f32.gmra.mxu0 %v432
        %v1434 = vpop.f32.mrf.mxu0
        %v1435 = vadd.f32 %v1322, %v1434
        %1436 = vmatmul.f32.gmra.mxu0 %v434
        %v1437 = vpop.f32.mrf.mxu0
        %v1438 = vadd.f32 %v1325, %v1437
        %1439 = vmatmul.f32.gmra.mxu0 %v436
        %v1440 = vpop.f32.mrf.mxu0
        %v1441 = vadd.f32 %v1328, %v1440
        %1442 = vmatmul.f32.gmra.mxu0 %v438
        %v1443 = vpop.f32.mrf.mxu0
        %v1444 = vadd.f32 %v1331, %v1443
        %1445 = vmatmul.f32.gmra.mxu0 %v440
        %v1446 = vpop.f32.mrf.mxu0
        %v1447 = vadd.f32 %v1334, %v1446
        %1448 = vmatmul.f32.gmra.mxu0 %v442
        %v1449 = vpop.f32.mrf.mxu0
        %v1450 = vadd.f32 %v1337, %v1449
        %1451 = vmatmul.f32.gmra.mxu0 %v444
        %v1452 = vpop.f32.mrf.mxu0
        %v1453 = vadd.f32 %v1340, %v1452
        %1454 = vmatmul.f32.gmra.mxu0 %v446
        %v1455 = vpop.f32.mrf.mxu0
        %v1456 = vadd.f32 %v1343, %v1455
        %1457 = vmatmul.f32.gmra.mxu0 %v448
        %v1458 = vpop.f32.mrf.mxu0
        %v1459 = vadd.f32 %v1346, %v1458
        %1460 = vmatmul.f32.gmra.mxu0 %v450
        %v1461 = vpop.f32.mrf.mxu0
        %v1462 = vadd.f32 %v1349, %v1461
        %1463 = vmatmul.f32.gmra.mxu0 %v452
        %v1464 = vpop.f32.mrf.mxu0
        %v1465 = vadd.f32 %v1352, %v1464
        %1466 = vmatmul.f32.gmra.mxu0 %v454
        %v1467 = vpop.f32.mrf.mxu0
        %v1468 = vadd.f32 %v1355, %v1467
        %1469 = vmatmul.f32.gmra.mxu0 %v456
        %v1470 = vpop.f32.mrf.mxu0
        %v1471 = vadd.f32 %v1358, %v1470
        %1472 = vmatmul.f32.gmra.mxu0 %v458
        %v1473 = vpop.f32.mrf.mxu0
        %v1474 = vadd.f32 %v1361, %v1473
        %1475 = vmatmul.f32.gmra.mxu0 %v460
        %v1476 = vpop.f32.mrf.mxu0
        %v1477 = vadd.f32 %v1364, %v1476
        %1478 = vmatmul.f32.gmra.mxu0 %v462
        %v1479 = vpop.f32.mrf.mxu0
        %v1480 = vadd.f32 %v1367, %v1479
        %1481 = vmatmul.f32.gmra.mxu0 %v464
        %v1482 = vpop.f32.mrf.mxu0
        %v1483 = vadd.f32 %v1370, %v1482
        %1484 = vmatmul.f32.gmra.mxu0 %v466
        %v1485 = vpop.f32.mrf.mxu0
        %v1486 = vadd.f32 %v1373, %v1485
        %1487 = vmatmul.f32.gmra.mxu0 %v468
        %v1488 = vpop.f32.mrf.mxu0
        %v1489 = vadd.f32 %v1376, %v1488
        %1490 = vmatmul.f32.gmra.mxu0 %v470
        %v1491 = vpop.f32.mrf.mxu0
        %v1492 = vadd.f32 %v1379, %v1491
        %1493 = vmatmul.f32.gmra.mxu0 %v472
        %v1494 = vpop.f32.mrf.mxu0
        %v1495 = vadd.f32 %v1382, %v1494
        %1496 = vmatmul.f32.gmra.mxu0 %v474
        %v1497 = vpop.f32.mrf.mxu0
        %v1498 = vadd.f32 %v1385, %v1497
        %1499 = vmatmul.f32.gmra.mxu0 %v476
        %v1500 = vpop.f32.mrf.mxu0
        %v1501 = vadd.f32 %v1388, %v1500
        %1502 = vmatmul.f32.gmra.mxu0 %v478
        %v1503 = vpop.f32.mrf.mxu0
        %v1504 = vadd.f32 %v1391, %v1503
        %1505 = vmatmul.f32.gmra.mxu0 %v480
        %v1506 = vpop.f32.mrf.mxu0
        %v1507 = vadd.f32 %v1394, %v1506
        %1508 = vmatmul.f32.gmra.mxu0 %v482
        %v1509 = vpop.f32.mrf.mxu0
        %v1510 = vadd.f32 %v1397, %v1509
        %1511 = vmatmul.f32.gmra.mxu0 %v484
        %v1512 = vpop.f32.mrf.mxu0
        %v1513 = vadd.f32 %v1400, %v1512
        %1514 = vmatmul.f32.gmra.mxu0 %v486
        %v1515 = vpop.f32.mrf.mxu0
        %v1516 = vadd.f32 %v1403, %v1515
        %1517 = vmatmul.f32.gmra.mxu0 %v488
        %v1518 = vpop.f32.mrf.mxu0
        %v1519 = vadd.f32 %v1406, %v1518
        %1520 = vdwg.mxu0
        %1521 = vst [vmem:[%s349] sm:$0xff] %v684
        %1522 = vst [vmem:[%s349 + $0x8] sm:$0xff] %v687
        %1523 = vst [vmem:[%s349 + $0x10] sm:$0xff] %v690
        %1524 = vst [vmem:[%s349 + $0x18] sm:$0xff] %v693
        %1525 = vst [vmem:[%s349 + $0x20] sm:$0xff] %v696
        %1526 = vst [vmem:[%s349 + $0x28] sm:$0xff] %v699
        %1527 = vst [vmem:[%s349 + $0x30] sm:$0xff] %v702
        %1528 = vst [vmem:[%s349 + $0x38] sm:$0xff] %v705
        %1529 = vst [vmem:[%s349 + $0x40] sm:$0xff] %v708
        %1530 = vst [vmem:[%s349 + $0x48] sm:$0xff] %v711
        %1531 = vst [vmem:[%s349 + $0x50] sm:$0xff] %v714
        %1532 = vst [vmem:[%s349 + $0x58] sm:$0xff] %v717
        %1533 = vst [vmem:[%s349 + $0x60] sm:$0xff] %v720
        %1534 = vst [vmem:[%s349 + $0x68] sm:$0xff] %v723
        %1535 = vst [vmem:[%s349 + $0x70] sm:$0xff] %v726
        %1536 = vst [vmem:[%s349 + $0x78] sm:$0xff] %v729
        %1537 = vst [vmem:[%s349 + $0x80] sm:$0xff] %v732
        %1538 = vst [vmem:[%s349 + $0x88] sm:$0xff] %v735
        %1539 = vst [vmem:[%s349 + $0x90] sm:$0xff] %v738
        %1540 = vst [vmem:[%s349 + $0x98] sm:$0xff] %v741
        %1541 = vst [vmem:[%s349 + $0xa0] sm:$0xff] %v744
        %1542 = vst [vmem:[%s349 + $0xa8] sm:$0xff] %v747
        %1543 = vst [vmem:[%s349 + $0xb0] sm:$0xff] %v750
        %1544 = vst [vmem:[%s349 + $0xb8] sm:$0xff] %v753
        %1545 = vst [vmem:[%s349 + $0xc0] sm:$0xff] %v756
        %1546 = vst [vmem:[%s349 + $0xc8] sm:$0xff] %v759
        %1547 = vst [vmem:[%s349 + $0xd0] sm:$0xff] %v762
        %1548 = vst [vmem:[%s349 + $0xd8] sm:$0xff] %v765
        %1549 = vst [vmem:[%s349 + $0xe0] sm:$0xff] %v768
        %1550 = vst [vmem:[%s349 + $0xe8] sm:$0xff] %v771
        %1551 = vst [vmem:[%s349 + $0xf0] sm:$0xff] %v774
        %1552 = vst [vmem:[%s349 + $0xf8] sm:$0xff] %v777
        %1553 = vst [vmem:[%s356] sm:$0xff] %v1200
        %1554 = vst [vmem:[%s356 + $0x8] sm:$0xff] %v1203
        %1555 = vst [vmem:[%s356 + $0x10] sm:$0xff] %v1206
        %1556 = vst [vmem:[%s356 + $0x18] sm:$0xff] %v1209
        %1557 = vst [vmem:[%s356 + $0x20] sm:$0xff] %v1212
        %1558 = vst [vmem:[%s356 + $0x28] sm:$0xff] %v1215
        %1559 = vst [vmem:[%s356 + $0x30] sm:$0xff] %v1218
        %1560 = vst [vmem:[%s356 + $0x38] sm:$0xff] %v1221
        %1561 = vst [vmem:[%s356 + $0x40] sm:$0xff] %v1224
        %1562 = vst [vmem:[%s356 + $0x48] sm:$0xff] %v1227
        %1563 = vst [vmem:[%s356 + $0x50] sm:$0xff] %v1230
        %1564 = vst [vmem:[%s356 + $0x58] sm:$0xff] %v1233
        %1565 = vst [vmem:[%s356 + $0x60] sm:$0xff] %v1236
        %1566 = vst [vmem:[%s356 + $0x68] sm:$0xff] %v1239
        %1567 = vst [vmem:[%s356 + $0x70] sm:$0xff] %v1242
        %1568 = vst [vmem:[%s356 + $0x78] sm:$0xff] %v1245
        %1569 = vst [vmem:[%s356 + $0x80] sm:$0xff] %v1248
        %1570 = vst [vmem:[%s356 + $0x88] sm:$0xff] %v1251
        %1571 = vst [vmem:[%s356 + $0x90] sm:$0xff] %v1254
        %1572 = vst [vmem:[%s356 + $0x98] sm:$0xff] %v1257
        %1573 = vst [vmem:[%s356 + $0xa0] sm:$0xff] %v1260
        %1574 = vst [vmem:[%s356 + $0xa8] sm:$0xff] %v1263
        %1575 = vst [vmem:[%s356 + $0xb0] sm:$0xff] %v1266
        %1576 = vst [vmem:[%s356 + $0xb8] sm:$0xff] %v1269
        %1577 = vst [vmem:[%s356 + $0xc0] sm:$0xff] %v1272
        %1578 = vst [vmem:[%s356 + $0xc8] sm:$0xff] %v1275
        %1579 = vst [vmem:[%s356 + $0xd0] sm:$0xff] %v1278
        %1580 = vst [vmem:[%s356 + $0xd8] sm:$0xff] %v1281
        %1581 = vst [vmem:[%s356 + $0xe0] sm:$0xff] %v1284
        %1582 = vst [vmem:[%s356 + $0xe8] sm:$0xff] %v1287
        %1583 = vst [vmem:[%s356 + $0xf0] sm:$0xff] %v1290
        %1584 = vst [vmem:[%s356 + $0xf8] sm:$0xff] %v1293
        %s1585 = scalar_lea.vmem %s349, 256 [#allocation10]
        %1586 = vst [vmem:[%s1585] sm:$0xff] %v910
        %1587 = vst [vmem:[%s1585 + $0x8] sm:$0xff] %v913
        %1588 = vst [vmem:[%s1585 + $0x10] sm:$0xff] %v916
        %1589 = vst [vmem:[%s1585 + $0x18] sm:$0xff] %v919
        %1590 = vst [vmem:[%s1585 + $0x20] sm:$0xff] %v922
        %1591 = vst [vmem:[%s1585 + $0x28] sm:$0xff] %v925
        %1592 = vst [vmem:[%s1585 + $0x30] sm:$0xff] %v928
        %1593 = vst [vmem:[%s1585 + $0x38] sm:$0xff] %v931
        %1594 = vst [vmem:[%s1585 + $0x40] sm:$0xff] %v934
        %1595 = vst [vmem:[%s1585 + $0x48] sm:$0xff] %v937
        %1596 = vst [vmem:[%s1585 + $0x50] sm:$0xff] %v940
        %1597 = vst [vmem:[%s1585 + $0x58] sm:$0xff] %v943
        %1598 = vst [vmem:[%s1585 + $0x60] sm:$0xff] %v946
        %1599 = vst [vmem:[%s1585 + $0x68] sm:$0xff] %v949
        %1600 = vst [vmem:[%s1585 + $0x70] sm:$0xff] %v952
        %1601 = vst [vmem:[%s1585 + $0x78] sm:$0xff] %v955
        %1602 = vst [vmem:[%s1585 + $0x80] sm:$0xff] %v958
        %1603 = vst [vmem:[%s1585 + $0x88] sm:$0xff] %v961
        %1604 = vst [vmem:[%s1585 + $0x90] sm:$0xff] %v964
        %1605 = vst [vmem:[%s1585 + $0x98] sm:$0xff] %v967
        %1606 = vst [vmem:[%s1585 + $0xa0] sm:$0xff] %v970
        %1607 = vst [vmem:[%s1585 + $0xa8] sm:$0xff] %v973
        %1608 = vst [vmem:[%s1585 + $0xb0] sm:$0xff] %v976
        %1609 = vst [vmem:[%s1585 + $0xb8] sm:$0xff] %v979
        %1610 = vst [vmem:[%s1585 + $0xc0] sm:$0xff] %v982
        %1611 = vst [vmem:[%s1585 + $0xc8] sm:$0xff] %v985
        %1612 = vst [vmem:[%s1585 + $0xd0] sm:$0xff] %v988
        %1613 = vst [vmem:[%s1585 + $0xd8] sm:$0xff] %v991
        %1614 = vst [vmem:[%s1585 + $0xe0] sm:$0xff] %v994
        %1615 = vst [vmem:[%s1585 + $0xe8] sm:$0xff] %v997
        %1616 = vst [vmem:[%s1585 + $0xf0] sm:$0xff] %v1000
        %1617 = vst [vmem:[%s1585 + $0xf8] sm:$0xff] %v1003
        %s1618 = scalar_lea.vmem %s356, 256 [#allocation11]
        %1619 = vst [vmem:[%s1618] sm:$0xff] %v1426
        %1620 = vst [vmem:[%s1618 + $0x8] sm:$0xff] %v1429
        %1621 = vst [vmem:[%s1618 + $0x10] sm:$0xff] %v1432
        %1622 = vst [vmem:[%s1618 + $0x18] sm:$0xff] %v1435
        %1623 = vst [vmem:[%s1618 + $0x20] sm:$0xff] %v1438
        %1624 = vst [vmem:[%s1618 + $0x28] sm:$0xff] %v1441
        %1625 = vst [vmem:[%s1618 + $0x30] sm:$0xff] %v1444
        %1626 = vst [vmem:[%s1618 + $0x38] sm:$0xff] %v1447
        %1627 = vst [vmem:[%s1618 + $0x40] sm:$0xff] %v1450
        %1628 = vst [vmem:[%s1618 + $0x48] sm:$0xff] %v1453
        %1629 = vst [vmem:[%s1618 + $0x50] sm:$0xff] %v1456
        %1630 = vst [vmem:[%s1618 + $0x58] sm:$0xff] %v1459
        %1631 = vst [vmem:[%s1618 + $0x60] sm:$0xff] %v1462
        %1632 = vst [vmem:[%s1618 + $0x68] sm:$0xff] %v1465
        %1633 = vst [vmem:[%s1618 + $0x70] sm:$0xff] %v1468
        %1634 = vst [vmem:[%s1618 + $0x78] sm:$0xff] %v1471
        %1635 = vst [vmem:[%s1618 + $0x80] sm:$0xff] %v1474
        %1636 = vst [vmem:[%s1618 + $0x88] sm:$0xff] %v1477
        %1637 = vst [vmem:[%s1618 + $0x90] sm:$0xff] %v1480
        %1638 = vst [vmem:[%s1618 + $0x98] sm:$0xff] %v1483
        %1639 = vst [vmem:[%s1618 + $0xa0] sm:$0xff] %v1486
        %1640 = vst [vmem:[%s1618 + $0xa8] sm:$0xff] %v1489
        %1641 = vst [vmem:[%s1618 + $0xb0] sm:$0xff] %v1492
        %1642 = vst [vmem:[%s1618 + $0xb8] sm:$0xff] %v1495
        %1643 = vst [vmem:[%s1618 + $0xc0] sm:$0xff] %v1498
        %1644 = vst [vmem:[%s1618 + $0xc8] sm:$0xff] %v1501
        %1645 = vst [vmem:[%s1618 + $0xd0] sm:$0xff] %v1504
        %1646 = vst [vmem:[%s1618 + $0xd8] sm:$0xff] %v1507
        %1647 = vst [vmem:[%s1618 + $0xe0] sm:$0xff] %v1510
        %1648 = vst [vmem:[%s1618 + $0xe8] sm:$0xff] %v1513
        %1649 = vst [vmem:[%s1618 + $0xf0] sm:$0xff] %v1516
        %1650 = vst [vmem:[%s1618 + $0xf8] sm:$0xff] %v1519
        %s1651 = sand.u32 %s150, 1
        %s1652 = scalar_lea.sflag [#allocation4], %s1651
        %s1653 = sand.u32 %s150, 1
        %s1654 = smul.addr %s1653, 512
        %s1655 = scalar_lea.vmem [#allocation10], %s1654
        %s1656 = sand.u32 %s178, 1
        %s1657 = scalar_lea.sflag [#allocation12], %s1656
        %s1658 = sand.u32 %s178, 1
        %s1659 = smul.addr %s1658, 512
        %s1660 = scalar_lea.vmem [#allocation11], %s1659
        // Predicated region
        $region53: #{tpu_custom_call.1} parent=35 // pred_check
          %p1661 = pneg %p160
        $region54: #{tpu_custom_call.1} parent=35 // pred_check_branch
          %1663 = sbr.rel (%p1661) target = $region56
        $region55: #{tpu_custom_call.1} parent=35 // pred_region
          #allocation14 [shape = 'u32[6]{0}', space=smem, size = 0x18, scoped, tag = 'DMA stride descriptor']
          %s1664 = smul.u32 32, %s35
          %1666 = vsyncadd %s1652, 0
          %s1667 = smul.addr %s34, 128
          %s1668 = sadd.s32 %s1664, %s1667
          %s1669 = smul.addr %s1668, 8
          %s1670 = scalar_lea.hbm %s4, %s1669
          %s1672 = sshll.u32 1, 14
          %s1673 = sxor.u32 4294967295, %s1672
          %s1676 = sshll.u32 7, 18
          %s1677 = sxor.u32 4294967295, %s1676
          %s1678 = sand.u32 0, %s1677
          %s1680 = sor.u32 %s1678, 0
          %s1681 = sshll.u32 %s1655, 4
          %s1682 = int_to_ptr.vmem [resolvable:$true] %s1681
          %s1683 = sshll.u32 %s1670, 4
          %s1684 = int_to_ptr.hbm [resolvable:$true] %s1683
          %1690 = sst [smem:[#allocation14]] 4096
          %s1691 = scalar_lea.smem [#allocation14], 1
          %1692 = sst [smem:[%s1691]] 8192
          %s1693 = scalar_lea.smem [#allocation14], 2
          %1694 = sst [smem:[%s1693]] 32
          %s1695 = scalar_lea.smem [#allocation14], 3
          %1696 = sst [smem:[%s1695]] 128
          %s1697 = scalar_lea.smem [#allocation14], 4
          %1698 = sst [smem:[%s1697]] 128
          %s1699 = scalar_lea.smem [#allocation14], 5
          %1700 = sst [smem:[%s1699]] 8
          %1702 = dma.general %s1682, 8192, %s1684, %s1652, [#allocation13], [#allocation14], %s1680, 0
        $region56: #{tpu_custom_call.1} parent=35 // pred_fallthru
          _
        // Predicated region
        $region57: #{tpu_custom_call.1} parent=35 // pred_check
          %p1703 = pneg %p188
        $region58: #{tpu_custom_call.1} parent=35 // pred_check_branch
          %1705 = sbr.rel (%p1703) target = $region60
        $region59: #{tpu_custom_call.1} parent=35 // pred_region
          #allocation16 [shape = 'u32[6]{0}', space=smem, size = 0x18, scoped, tag = 'DMA stride descriptor']
          %s1706 = smul.u32 32, %s35
          %1708 = vsyncadd %s1657, 0
          %s1709 = smul.addr %s34, 128
          %s1710 = sadd.s32 %s1706, %s1709
          %s1711 = smul.addr %s1710, 8
          %s1712 = scalar_lea.hbm %s5, %s1711
          %s1714 = sshll.u32 1, 14
          %s1715 = sxor.u32 4294967295, %s1714
          %s1718 = sshll.u32 7, 18
          %s1719 = sxor.u32 4294967295, %s1718
          %s1720 = sand.u32 0, %s1719
          %s1722 = sor.u32 %s1720, 0
          %s1723 = sshll.u32 %s1660, 4
          %s1724 = int_to_ptr.vmem [resolvable:$true] %s1723
          %s1725 = sshll.u32 %s1712, 4
          %s1726 = int_to_ptr.hbm [resolvable:$true] %s1725
          %1732 = sst [smem:[#allocation16]] 4096
          %s1733 = scalar_lea.smem [#allocation16], 1
          %1734 = sst [smem:[%s1733]] 8192
          %s1735 = scalar_lea.smem [#allocation16], 2
          %1736 = sst [smem:[%s1735]] 32
          %s1737 = scalar_lea.smem [#allocation16], 3
          %1738 = sst [smem:[%s1737]] 128
          %s1739 = scalar_lea.smem [#allocation16], 4
          %1740 = sst [smem:[%s1739]] 128
          %s1741 = scalar_lea.smem [#allocation16], 5
          %1742 = sst [smem:[%s1741]] 8
          %1744 = dma.general %s1724, 8192, %s1726, %s1657, [#allocation15], [#allocation16], %s1722, 0
        $region60: #{tpu_custom_call.1} parent=35 // pred_fallthru
          _
      $region36: #{tpu_custom_call.1} parent=5 // pred_fallthru
        _
      %p1745 = scmp.le.s32.totalorder 2, %s25
      // Predicated region
      $region61: #{tpu_custom_call.1} parent=5 // pred_check
        %p1746 = pneg %p1745
      $region62: #{tpu_custom_call.1} parent=5 // pred_check_branch
        %1748 = sbr.rel (%p1746) target = $region64
      $region63: #{tpu_custom_call.1} parent=5 // pred_region
        %s1749 = ssub.s32 %s25, 2
        // Predicated region
        $region65: #{tpu_custom_call.1} parent=63 // pred_check
          %p1750 = pneg %p166
        $region66: #{tpu_custom_call.1} parent=63 // pred_check_branch
          %1752 = sbr.rel (%p1750) target = $region68
        $region67: #{tpu_custom_call.1} parent=63 // pred_region
          %s1753 = sand.u32 %s151, 1
          %s1754 = scalar_lea.sflag [#allocation4], %s1753
          %s1755 = sand.u32 %s151, 1
          %s1756 = smul.addr %s1755, 512
          %s1757 = scalar_lea.vmem [#allocation10], %s1756
          %1759 = dma.done %s1754, 8192
        $region68: #{tpu_custom_call.1} parent=63 // pred_fallthru
          _
        // Predicated region
        $region69: #{tpu_custom_call.1} parent=63 // pred_check
          %p1760 = pneg %p194
        $region70: #{tpu_custom_call.1} parent=63 // pred_check_branch
          %1762 = sbr.rel (%p1760) target = $region72
        $region71: #{tpu_custom_call.1} parent=63 // pred_region
          %s1763 = sand.u32 %s179, 1
          %s1764 = scalar_lea.sflag [#allocation12], %s1763
          %s1765 = sand.u32 %s179, 1
          %s1766 = smul.addr %s1765, 512
          %s1767 = scalar_lea.vmem [#allocation11], %s1766
          %1769 = dma.done %s1764, 8192
        $region72: #{tpu_custom_call.1} parent=63 // pred_fallthru
          _
      $region64: #{tpu_custom_call.1} parent=5 // pred_fallthru
        _
    $region6: #{tpu_custom_call.1} parent=1 // loop_footer
      %s29 = sadd.s32 1, %s25
    $region7: #{tpu_custom_call.1} parent=1 // loop_footer_branch
      %24 = sbr.rel target = $region3
    $region8: #{tpu_custom_call.1} parent=1 // loop_exit
      _
    %1770 = vsyncpa [#allocation3], 1
    %s1771 = scalar_lea.sflag [#allocation3], 1
    %1772 = vsyncpa %s1771, 1
    %1773 = vsyncpa [#allocation6], 1
    %s1774 = scalar_lea.sflag [#allocation6], 1
    %1775 = vsyncpa %s1774, 1
    %1776 = vsyncpa [#allocation9], 1
    %1777 = vsyncpa [#allocation4], 1
    %s1778 = scalar_lea.sflag [#allocation4], 1
    %1779 = vsyncpa %s1778, 1
    %1780 = vsyncpa [#allocation12], 1
    %s1781 = scalar_lea.sflag [#allocation12], 1
    %1782 = vsyncpa %s1781, 1

</llo_original>
